<compile_context>
chip_gen: v7x
topology: tpu7x:2x2x1
jax: 0.10.0
libtpu: 0.0.40
codegen_flags: <defaults>
</compile_context>

<pallas_src>
import functools

import jax
import jax.numpy as jnp
from jax import lax
from jax.experimental import pallas as pl
from jax.experimental.pallas import tpu as pltpu


# ----------------------------------------------------------------------------
# pltpu.roll direction probe (run once). Returns +1 if pltpu.roll follows
# jnp.roll semantics (result[i] = x[(i - shift) % n]), -1 if reversed, and
# None if roll is unusable (-> slice+concat fallback keeps correctness).
# ----------------------------------------------------------------------------
@functools.lru_cache(maxsize=None)
def _roll_sign():
    def k(x_ref, o_ref):
        o_ref[...] = pltpu.roll(x_ref[...], shift=1, axis=1)

    x = jnp.arange(8 * 128, dtype=jnp.float32).reshape(8, 128)
    try:
        out = pl.pallas_call(
            k, out_shape=jax.ShapeDtypeStruct((8, 128), jnp.float32))(x)
        if bool(jnp.all(out == jnp.roll(x, 1, axis=1))):
            return 1
        if bool(jnp.all(out == jnp.roll(x, -1, axis=1))):
            return -1
    except Exception:
        pass
    return None


def _lane_shift(x, off, n, roll_sign):
    """result[:, p] = x[:, (p + off) % n] for a static Python int `off`."""
    off = off % n
    if off == 0:
        return x
    if roll_sign is None:
        # Fallback path (no XLU roll): materializes one copy per tap.
        return jnp.concatenate([x[:, off:], x[:, :off]], axis=1)
    return pltpu.roll(x, shift=(-roll_sign * off) % n, axis=1)


# ----------------------------------------------------------------------------
# Kernel: one 'Block' (WS-conv3x3 + GroupNorm + optional (scale+1, shift)
# modulation + SiLU), optionally fused with the residual path, on one
# group-aligned channel tile of one image.
# ----------------------------------------------------------------------------
def _block_kernel(w_img, modulate, res_mode, padded, roll_sign, *refs):
    it = iter(refs)
    x_ref = next(it)        # (1, Cin,  HWp)  bf16
    w_ref = next(it)        # (3, Ct,  3Cin)  bf16  rows dy=-1,0,+1; cols dx=-1|0|+1
    m_ref = next(it)        # (5, 1,   HWp)   bf16  [col-1, col+1, row-1, row+1, valid]
    g_ref = next(it)        # (Ct, Ct)        f32   in-tile group average (pre-scaled)
    a_ref = next(it)        # (Ct, 4)         f32   [bias, gamma, beta, res_bias]
    ss_ref = next(it) if modulate else None            # (1, Ct, 2) f32
    xres_ref = next(it) if res_mode != "none" else None
    rw_ref = next(it) if res_mode == "conv" else None   # (Ct, Cres) bf16
    o_ref = next(it)        # (1, Ct, HWp)

    x = x_ref[0]                                   # (Cin, HWp) bf16
    hwp = x.shape[1]
    ct = a_ref.shape[0]

    col_masks = (m_ref[0], None, m_ref[1])         # dx = -1, 0, +1 (input side)
    row_masks = (m_ref[2], None, m_ref[3])         # dy = -1, 0, +1 (output side)

    # ---- 3x3 WS-conv: per kernel row, 3 lane-rolled taps -> one K=3*Cin dot ----
    acc = jnp.zeros((ct, hwp), jnp.float32)
    for iy, dy in enumerate((-1, 0, 1)):
        taps = []
        for ix, dx in enumerate((-1, 0, 1)):
            t = _lane_shift(x, dy * w_img + dx, hwp, roll_sign)
            if col_masks[ix] is not None:          # centre column mask is all-ones
                t = t * col_masks[ix]
            taps.append(t)
        stacked = jnp.concatenate(taps, axis=0)                   # (3Cin, HWp) bf16
        part = jnp.dot(w_ref[iy], stacked,
                       preferred_element_type=jnp.float32)        # (Ct, HWp) f32
        if row_masks[iy] is not None:              # centre row mask is all-ones
            part = part * row_masks[iy]
        acc = acc + part

    aff = a_ref[...]
    y = acc + aff[:, 0:1]                          # + conv bias

    # ---- GroupNorm: f32 stats, one N=2 dot against the in-tile group matrix ----
    yv = y * m_ref[4] if padded else y             # exclude padded lanes from stats
    s1 = jnp.sum(yv, axis=1, keepdims=True)        # (Ct, 1)
    s2 = jnp.sum(yv * yv, axis=1, keepdims=True)   # (Ct, 1)
    gstats = jnp.dot(g_ref[...], jnp.concatenate([s1, s2], axis=1),
                     preferred_element_type=jnp.float32)          # (Ct, 2)
    mean = gstats[:, 0:1]
    var = gstats[:, 1:2] - mean * mean
    xn = (y - mean) * lax.rsqrt(var + 1e-5)
    xn = xn * aff[:, 1:2] + aff[:, 2:3]

    # ---- (scale + 1, shift) modulation from the time embedding ----
    if modulate:
        ss = ss_ref[0]                             # (Ct, 2)
        xn = xn * (ss[:, 0:1] + 1.0) + ss[:, 1:2]

    # ---- SiLU ----
    out = xn * jax.nn.sigmoid(xn)

    # ---- fused residual (block2 only) ----
    if res_mode == "identity":
        out = out + xres_ref[0].astype(jnp.float32)
    elif res_mode == "conv":
        out = out + jnp.dot(rw_ref[...], xres_ref[0],
                            preferred_element_type=jnp.float32) + aff[:, 3:4]

    o_ref[0] = out.astype(o_ref.dtype)


# ----------------------------------------------------------------------------
# Hoisted constants (computed once in plain JAX, not per grid step).
# ----------------------------------------------------------------------------
def _standardize(w):
    """Weight standardization in f32 (eps=1e-5 float32 path, biased variance)."""
    m = jnp.mean(w, axis=(1, 2, 3), keepdims=True)
    v = jnp.var(w, axis=(1, 2, 3), keepdims=True)
    return (w - m) * lax.rsqrt(v + 1e-5)


def _conv_masks(h, w, hwp):
    """(5, 1, HWp) bf16: [col dx=-1, col dx=+1, row dy=-1, row dy=+1, valid]."""
    idx = jnp.arange(hwp)
    hh, ww = idx // w, idx % w
    valid = idx < h * w
    rows = [
        (ww >= 1) & valid,
        (ww + 1 < w) & valid,
        (hh >= 1) & valid,
        (hh + 1 < h) & valid,
        valid,
    ]
    return jnp.stack(rows).astype(jnp.bfloat16).reshape(5, 1, hwp)


def _pick_ctile(cout, groups, target):
    """Largest group-aligned, 8-aligned channel tile <= target dividing Cout."""
    cg = cout // groups
    if cout <= target:
        return cout
    best = cout
    t = cg
    while t < cout:
        if cout % t == 0 and t <= target and t % 8 == 0:
            best = t
        t += cg
    return best


def _compiler_params():
    kind = ""
    try:
        kind = jax.devices()[0].device_kind.lower()
    except Exception:
        pass
    if "v7" in kind:
        vmem = 48 * 1024 * 1024          # headroom under v7x's 64 MiB physical VMEM
    elif ("v2" in kind) or ("v3" in kind):
        vmem = None                      # keep compiler default on older chips
    else:
        vmem = 100 * 1024 * 1024         # v4 / v5e / v6e: 128 MiB physical
    return pltpu.CompilerParams(
        dimension_semantics=("parallel", "parallel"),
        vmem_limit_bytes=vmem)


# ----------------------------------------------------------------------------
# pallas_call wrapper for one Block.
# ----------------------------------------------------------------------------
def _run_block(x_cm, w_std, bias, gamma, beta, *, h_img, w_img, hw, groups,
               ctile_target, out_dtype, scale_shift=None,
               xres=None, res_w=None, res_b=None):
    b, cin, hwp = x_cm.shape
    cout = w_std.shape[0]
    cg = cout // groups
    ct = _pick_ctile(cout, groups, ctile_target)
    n_ct = cout // ct
    padded = (hwp != hw)
    modulate = scale_shift is not None
    if xres is None:
        res_mode = "none"
    elif res_w is None:
        res_mode = "identity"
    else:
        res_mode = "conv"
    roll_sign = _roll_sign()

    # Conv weights per kernel row: (3, Cout, 3*Cin) bf16, column order dx=-1,0,+1.
    w_rows = jnp.stack(
        [jnp.concatenate([w_std[:, :, ky, kx] for kx in range(3)], axis=1)
         for ky in range(3)], axis=0).astype(jnp.bfloat16)

    masks = _conv_masks(h_img, w_img, hwp)

    # In-tile group-average operator, pre-scaled by 1/(cg * HW_true).
    loc = jnp.arange(ct)
    gsel = (loc[:, None] // cg == loc[None, :] // cg).astype(jnp.float32)
    gsel = gsel / float(cg * hw)

    rb = (jnp.asarray(res_b, jnp.float32) if res_mode == "conv"
          else jnp.zeros((cout,), jnp.float32))
    affine = jnp.stack([jnp.asarray(bias, jnp.float32),
                        jnp.asarray(gamma, jnp.float32),
                        jnp.asarray(beta, jnp.float32),
                        rb], axis=1)                               # (Cout, 4)

    args = [x_cm, w_rows, masks, gsel, affine]
    in_specs = [
        pl.BlockSpec((1, cin, hwp), lambda i, j: (i, 0, 0)),
        pl.BlockSpec((3, ct, 3 * cin), lambda i, j: (0, j, 0)),
        pl.BlockSpec((5, 1, hwp), lambda i, j: (0, 0, 0)),
        pl.BlockSpec((ct, ct), lambda i, j: (0, 0)),
        pl.BlockSpec((ct, 4), lambda i, j: (j, 0)),
    ]
    if modulate:
        scale, shift = scale_shift
        ss = jnp.stack([jnp.asarray(scale, jnp.float32),
                        jnp.asarray(shift, jnp.float32)], axis=-1)  # (B, Cout, 2)
        args.append(ss)
        in_specs.append(pl.BlockSpec((1, ct, 2), lambda i, j: (i, j, 0)))
    if res_mode == "identity":
        args.append(xres)
        in_specs.append(pl.BlockSpec((1, ct, hwp), lambda i, j: (i, j, 0)))
    elif res_mode == "conv":
        cres = xres.shape[1]
        args.append(xres)
        args.append(jnp.asarray(res_w, jnp.float32).astype(jnp.bfloat16))
        in_specs.append(pl.BlockSpec((1, cres, hwp), lambda i, j: (i, 0, 0)))
        in_specs.append(pl.BlockSpec((ct, cres), lambda i, j: (j, 0)))

    kernel = functools.partial(_block_kernel, w_img, modulate, res_mode,
                               padded, roll_sign)
    return pl.pallas_call(
        kernel,
        out_shape=jax.ShapeDtypeStruct((b, cout, hwp), out_dtype),
        grid=(b, n_ct),
        in_specs=in_specs,
        out_specs=pl.BlockSpec((1, ct, hwp), lambda i, j: (i, j, 0)),
        compiler_params=_compiler_params(),
    )(*args)


# ----------------------------------------------------------------------------
# Full ResnetBlock forward (NCHW in, NCHW out).
# ----------------------------------------------------------------------------
def resnet_block_forward(x_nchw, time_emb, params, groups=8, ctile_target=256):
    b, cin, h_img, w_img = x_nchw.shape
    cout = params["conv1_w"].shape[0]
    assert cout % groups == 0, "GroupNorm requires channels % groups == 0"
    hw = h_img * w_img
    hwp = ((hw + 127) // 128) * 128            # lane-dense H*W

    # Channel-major (B, C, HWp) is a (padded) free view of NCHW; bf16 MXU operands.
    x_cm = x_nchw.reshape(b, cin, hw).astype(jnp.bfloat16)
    if hwp != hw:
        x_cm = jnp.pad(x_cm, ((0, 0), (0, 0), (0, hwp - hw)))

    # Hoisted weight standardization (f32, eps=1e-5).
    w1 = _standardize(params["conv1_w"].astype(jnp.float32))
    w2 = _standardize(params["conv2_w"].astype(jnp.float32))

    # Time MLP: SiLU -> Linear -> chunk(scale, shift); left to plain XLA.
    if time_emb is not None:
        t = time_emb.astype(jnp.float32)
        ss = (t * jax.nn.sigmoid(t)) @ params["mlp_w"].astype(jnp.float32)
        ss = ss + params["mlp_b"].astype(jnp.float32)
        scale_shift = (ss[:, :cout], ss[:, cout:])
    else:
        scale_shift = None

    # Residual path: 1x1 conv, or Identity (only valid when dim == dim_out).
    res_w = params.get("res_w")
    res_b = params.get("res_b")
    if res_w is None:
        assert cin == cout, "Identity residual requires dim == dim_out"

    # block1 (with scale/shift); bf16 intermediate halves HBM traffic.
    # NOTE: bf16 intermediate + bf16 MXU operands trade ~0.5% relative error
    # for bandwidth; statistics stay in f32.
    h1 = _run_block(x_cm, w1, params["conv1_b"], params["gn1_g"], params["gn1_b"],
                    h_img=h_img, w_img=w_img, hw=hw, groups=groups,
                    ctile_target=ctile_target, out_dtype=jnp.bfloat16,
                    scale_shift=scale_shift)
    # block2 + fused residual (1x1 conv, or plain add when Identity); f32 output.
    out = _run_block(h1, w2, params["conv2_b"], params["gn2_g"], params["gn2_b"],
                     h_img=h_img, w_img=w_img, hw=hw, groups=groups,
                     ctile_target=ctile_target, out_dtype=jnp.float32,
                     xres=x_cm, res_w=res_w, res_b=res_b)
    return out[:, :, :hw].reshape(b, cout, h_img, w_img)


# ----------------------------------------------------------------------------
# Plain-JAX f32 reference (correctness sanity check only).
# ----------------------------------------------------------------------------
def _reference(x, time_emb, params, groups):
    def ws_conv(inp, w, bias):
        m = jnp.mean(w, axis=(1, 2, 3), keepdims=True)
        v = jnp.var(w, axis=(1, 2, 3), keepdims=True)
        wn = (w - m) * lax.rsqrt(v + 1e-5)
        out = lax.conv_general_dilated(
            inp, wn, window_strides=(1, 1), padding="SAME",
            dimension_numbers=("NCHW", "OIHW", "NCHW"))
        return out + bias.reshape(1, -1, 1, 1)

    def group_norm(inp, g, bta):
        n, c, hh, ww = inp.shape
        xg = inp.reshape(n, groups, c // groups, hh, ww)
        m = jnp.mean(xg, axis=(2, 3, 4), keepdims=True)
        v = jnp.var(xg, axis=(2, 3, 4), keepdims=True)
        xn = ((xg - m) / jnp.sqrt(v + 1e-5)).reshape(n, c, hh, ww)
        return xn * g.reshape(1, -1, 1, 1) + bta.reshape(1, -1, 1, 1)

    silu = lambda v: v * jax.nn.sigmoid(v)
    cout = params["conv1_w"].shape[0]

    h = ws_conv(x, params["conv1_w"], params["conv1_b"])
    h = group_norm(h, params["gn1_g"], params["gn1_b"])
    if time_emb is not None:
        ss = silu(time_emb) @ params["mlp_w"] + params["mlp_b"]
        scale, shift = ss[:, :cout], ss[:, cout:]
        h = h * (scale[:, :, None, None] + 1.0) + shift[:, :, None, None]
    h = silu(h)
    h = ws_conv(h, params["conv2_w"], params["conv2_b"])
    h = group_norm(h, params["gn2_g"], params["gn2_b"])
    h = silu(h)
    if params.get("res_w") is None:
        res = x
    else:
        res = jnp.einsum("oc,bchw->bohw", params["res_w"], x) \
              + params["res_b"].reshape(1, -1, 1, 1)
    return h + res


if __name__ == "__main__":
    def make_params(key, dim, dim_out, time_dim, res_conv):
        ks = jax.random.split(key, 12)
        return {
            "conv1_w": 0.1 * jax.random.normal(ks[0], (dim_out, dim, 3, 3), jnp.float32),
            "conv1_b": 0.1 * jax.random.normal(ks[1], (dim_out,), jnp.float32),
            "gn1_g": 1.0 + 0.1 * jax.random.normal(ks[2], (dim_out,), jnp.float32),
            "gn1_b": 0.1 * jax.random.normal(ks[3], (dim_out,), jnp.float32),
            "conv2_w": 0.1 * jax.random.normal(ks[4], (dim_out, dim_out, 3, 3), jnp.float32),
            "conv2_b": 0.1 * jax.random.normal(ks[5], (dim_out,), jnp.float32),
            "gn2_g": 1.0 + 0.1 * jax.random.normal(ks[6], (dim_out,), jnp.float32),
            "gn2_b": 0.1 * jax.random.normal(ks[7], (dim_out,), jnp.float32),
            "mlp_w": 0.1 * jax.random.normal(ks[8], (time_dim, 2 * dim_out), jnp.float32),
            "mlp_b": 0.1 * jax.random.normal(ks[9], (2 * dim_out,), jnp.float32),
            # res_conv = Conv2d(dim, dim_out, 1): weight stored squeezed (Cout, Cin).
            "res_w": (0.1 * jax.random.normal(ks[10], (dim_out, dim), jnp.float32)
                      if res_conv else None),
            "res_b": (0.1 * jax.random.normal(ks[11], (dim_out,), jnp.float32)
                      if res_conv else None),
        }

    key = jax.random.PRNGKey(0)
    k_a, k_b, kx1, kt1, kx2, kt2 = jax.random.split(key, 6)
    B, H, W, TDIM, GROUPS = 2, 16, 16, 32, 8

    # Case A: dim != dim_out (fused 1x1 residual conv) with two group-aligned
    # channel tiles (ctile_target=16 -> grid=(B, 2)) to exercise the tiling path.
    DIM, DIM_OUT = 8, 32
    params_a = make_params(k_a, DIM, DIM_OUT, TDIM, res_conv=True)
    x_a = jax.random.normal(kx1, (B, DIM, H, W), jnp.float32)
    t_a = jax.random.normal(kt1, (B, TDIM), jnp.float32)
    out_a = jax.block_until_ready(
        resnet_block_forward(x_a, t_a, params_a, groups=GROUPS, ctile_target=16))
    assert out_a.shape == (B, DIM_OUT, H, W), out_a.shape
    assert bool(jnp.all(jnp.isfinite(out_a)))
    err_a = float(jnp.max(jnp.abs(out_a - _reference(x_a, t_a, params_a, GROUPS))))
    assert err_a < 0.25, f"case A max abs error vs f32 reference: {err_a}"

    # Case B: dim == dim_out (Identity residual -> skipped matmul), single tile.
    DIM_B = 16
    params_b = make_params(k_b, DIM_B, DIM_B, TDIM, res_conv=False)
    x_b = jax.random.normal(kx2, (B, DIM_B, H, W), jnp.float32)
    t_b = jax.random.normal(kt2, (B, TDIM), jnp.float32)
    out_b = jax.block_until_ready(
        resnet_block_forward(x_b, t_b, params_b, groups=GROUPS))
    assert out_b.shape == (B, DIM_B, H, W), out_b.shape
    assert bool(jnp.all(jnp.isfinite(out_b)))
    err_b = float(jnp.max(jnp.abs(out_b - _reference(x_b, t_b, params_b, GROUPS))))
    assert err_b < 0.25, f"case B max abs error vs f32 reference: {err_b}"

    print("KERNEL_OK")
</pallas_src>

<mosaic_0001>
module attributes {stable_mosaic.version = 11 : i64} {
  func.func @k(%arg0: memref<8x128xf32, #tpu.memory_space<vmem>>, %arg1: memref<8x128xf32, #tpu.memory_space<vmem>>) attributes {dimension_semantics = [], scalar_prefetch = 0 : i64, scratch_operands = 0 : i64, tpu.core_type = #tpu.core_type<tc>} {
    %c0 = arith.constant 0 : index
    %c0_0 = arith.constant 0 : index
    %0 = vector.load %arg0[%c0, %c0_0] : memref<8x128xf32, #tpu.memory_space<vmem>>, vector<8x128xf32>
    %c1_i32 = arith.constant 1 : i32
    %1 = tpu.dynamic_rotate %0 by %c1_i32 dim 1 : vector<8x128xf32>, i32 -> vector<8x128xf32>
    %c0_1 = arith.constant 0 : index
    %c0_2 = arith.constant 0 : index
    %2 = vector.load %arg1[%c0_1, %c0_2] : memref<8x128xf32, #tpu.memory_space<vmem>>, vector<8x128xf32>
    tpu.vector_store %arg1[%c0_1, %c0_2], %1 {strides = array<i32>} : memref<8x128xf32, #tpu.memory_space<vmem>>, vector<8x128xf32>,
    return
  }
}

module attributes {stable_mosaic.version = 11 : i64} {
  func.func @_block_kernel(%arg0: i32, %arg1: i32, %arg2: memref<1x8x256xbf16, #tpu.memory_space<vmem>>, %arg3: memref<3x16x24xbf16, #tpu.memory_space<vmem>>, %arg4: memref<5x1x256xbf16, #tpu.memory_space<vmem>>, %arg5: memref<16x16xf32, #tpu.memory_space<vmem>>, %arg6: memref<16x4xf32, #tpu.memory_space<vmem>>, %arg7: memref<1x16x2xf32, #tpu.memory_space<vmem>>, %arg8: memref<1x16x256xbf16, #tpu.memory_space<vmem>>) attributes {dimension_semantics = [#tpu.dimension_semantics<parallel>, #tpu.dimension_semantics<parallel>], iteration_bounds = array<i64: 2, 2>, scalar_prefetch = 0 : i64, scratch_operands = 0 : i64, tpu.core_type = #tpu.core_type<tc>, window_params = [{transform_indices = @transform_0, window_bounds = array<i64: 1, 8, 256>}, {transform_indices = @transform_1, window_bounds = array<i64: 3, 16, 24>}, {pipeline_mode = #tpu.pipeline_mode<synchronous>, transform_indices = @transform_2, window_bounds = array<i64: 5, 1, 256>}, {pipeline_mode = #tpu.pipeline_mode<synchronous>, transform_indices = @transform_3, window_bounds = array<i64: 16, 16>}, {transform_indices = @transform_4, window_bounds = array<i64: 16, 4>}, {transform_indices = @transform_5, window_bounds = array<i64: 1, 16, 2>}, {transform_indices = @transform_6, window_bounds = array<i64: 1, 16, 256>}]} {
    %c0 = arith.constant 0 : index
    %c0_0 = arith.constant 0 : index
    %c0_1 = arith.constant 0 : index
    %0 = vector.load %arg2[%c0, %c0_0, %c0_1] : memref<1x8x256xbf16, #tpu.memory_space<vmem>>, vector<1x8x256xbf16>
    %1 = vector.shape_cast %0 : vector<1x8x256xbf16> to vector<8x256xbf16>
    %c0_2 = arith.constant 0 : index
    %c0_3 = arith.constant 0 : index
    %c0_4 = arith.constant 0 : index
    %2 = vector.load %arg4[%c0_2, %c0_3, %c0_4] : memref<5x1x256xbf16, #tpu.memory_space<vmem>>, vector<1x1x256xbf16>
    %3 = vector.shape_cast %2 : vector<1x1x256xbf16> to vector<1x256xbf16>
    %c1 = arith.constant 1 : index
    %c0_5 = arith.constant 0 : index
    %c0_6 = arith.constant 0 : index
    %4 = vector.load %arg4[%c1, %c0_5, %c0_6] : memref<5x1x256xbf16, #tpu.memory_space<vmem>>, vector<1x1x256xbf16>
    %5 = vector.shape_cast %4 : vector<1x1x256xbf16> to vector<1x256xbf16>
    %c2 = arith.constant 2 : index
    %c0_7 = arith.constant 0 : index
    %c0_8 = arith.constant 0 : index
    %6 = vector.load %arg4[%c2, %c0_7, %c0_8] : memref<5x1x256xbf16, #tpu.memory_space<vmem>>, vector<1x1x256xbf16>
    %7 = vector.shape_cast %6 : vector<1x1x256xbf16> to vector<1x256xbf16>
    %c3 = arith.constant 3 : index
    %c0_9 = arith.constant 0 : index
    %c0_10 = arith.constant 0 : index
    %8 = vector.load %arg4[%c3, %c0_9, %c0_10] : memref<5x1x256xbf16, #tpu.memory_space<vmem>>, vector<1x1x256xbf16>
    %9 = vector.shape_cast %8 : vector<1x1x256xbf16> to vector<1x256xbf16>
    %cst = arith.constant 0.000000e+00 : f32
    %10 = vector.broadcast %cst : f32 to vector<16x256xf32>
    %11 = vector.extract_strided_slice %1 {offsets = [0, 239], sizes = [8, 17], strides = [1, 1]} : vector<8x256xbf16> to vector<8x17xbf16>
    %12 = vector.extract_strided_slice %1 {offsets = [0, 0], sizes = [8, 239], strides = [1, 1]} : vector<8x256xbf16> to vector<8x239xbf16>
    %13 = tpu.concatenate %11, %12 in 1 : vector<8x17xbf16>, vector<8x239xbf16> -> vector<8x256xbf16>
    %14 = vector.broadcast %3 : vector<1x256xbf16> to vector<8x256xbf16>
    %15 = arith.mulf %13, %14 : vector<8x256xbf16>
    %16 = vector.extract_strided_slice %1 {offsets = [0, 240], sizes = [8, 16], strides = [1, 1]} : vector<8x256xbf16> to vector<8x16xbf16>
    %17 = vector.extract_strided_slice %1 {offsets = [0, 0], sizes = [8, 240], strides = [1, 1]} : vector<8x256xbf16> to vector<8x240xbf16>
    %18 = tpu.concatenate %16, %17 in 1 : vector<8x16xbf16>, vector<8x240xbf16> -> vector<8x256xbf16>
    %19 = vector.extract_strided_slice %1 {offsets = [0, 241], sizes = [8, 15], strides = [1, 1]} : vector<8x256xbf16> to vector<8x15xbf16>
    %20 = vector.extract_strided_slice %1 {offsets = [0, 0], sizes = [8, 241], strides = [1, 1]} : vector<8x256xbf16> to vector<8x241xbf16>
    %21 = tpu.concatenate %19, %20 in 1 : vector<8x15xbf16>, vector<8x241xbf16> -> vector<8x256xbf16>
    %22 = vector.broadcast %5 : vector<1x256xbf16> to vector<8x256xbf16>
    %23 = arith.mulf %21, %22 : vector<8x256xbf16>
    %24 = tpu.concatenate %15, %18, %23 in 0 : vector<8x256xbf16>, vector<8x256xbf16>, vector<8x256xbf16> -> vector<24x256xbf16>
    %c0_11 = arith.constant 0 : index
    %c0_12 = arith.constant 0 : index
    %c0_13 = arith.constant 0 : index
    %25 = vector.load %arg3[%c0_11, %c0_12, %c0_13] : memref<3x16x24xbf16, #tpu.memory_space<vmem>>, vector<1x16x24xbf16>
    %26 = vector.shape_cast %25 : vector<1x16x24xbf16> to vector<16x24xbf16>
    %cst_14 = arith.constant dense<0.000000e+00> : vector<16x256xf32>
    %27 = tpu.matmul %26, %24, %cst_14 {dimension_numbers = #tpu.dot_dimension_numbers<[1], [0], [0], [1], [0, 0, 1, 1], [], []>} : vector<16x24xbf16>, vector<24x256xbf16>, vector<16x256xf32> -> vector<16x256xf32>
    %28 = arith.extf %7 : vector<1x256xbf16> to vector<1x256xf32>
    %29 = vector.broadcast %28 : vector<1x256xf32> to vector<16x256xf32>
    %30 = arith.mulf %27, %29 : vector<16x256xf32>
    %31 = arith.addf %10, %30 : vector<16x256xf32>
    %32 = vector.extract_strided_slice %1 {offsets = [0, 255], sizes = [8, 1], strides = [1, 1]} : vector<8x256xbf16> to vector<8x1xbf16>
    %33 = vector.extract_strided_slice %1 {offsets = [0, 0], sizes = [8, 255], strides = [1, 1]} : vector<8x256xbf16> to vector<8x255xbf16>
    %34 = tpu.concatenate %32, %33 in 1 : vector<8x1xbf16>, vector<8x255xbf16> -> vector<8x256xbf16>
    %35 = vector.broadcast %3 : vector<1x256xbf16> to vector<8x256xbf16>
    %36 = arith.mulf %34, %35 : vector<8x256xbf16>
    %37 = vector.extract_strided_slice %1 {offsets = [0, 1], sizes = [8, 255], strides = [1, 1]} : vector<8x256xbf16> to vector<8x255xbf16>
    %38 = vector.extract_strided_slice %1 {offsets = [0, 0], sizes = [8, 1], strides = [1, 1]} : vector<8x256xbf16> to vector<8x1xbf16>
    %39 = tpu.concatenate %37, %38 in 1 : vector<8x255xbf16>, vector<8x1xbf16> -> vector<8x256xbf16>
    %40 = vector.broadcast %5 : vector<1x256xbf16> to vector<8x256xbf16>
    %41 = arith.mulf %39, %40 : vector<8x256xbf16>
    %42 = tpu.concatenate %36, %1, %41 in 0 : vector<8x256xbf16>, vector<8x256xbf16>, vector<8x256xbf16> -> vector<24x256xbf16>
    %c1_15 = arith.constant 1 : index
    %c0_16 = arith.constant 0 : index
    %c0_17 = arith.constant 0 : index
    %43 = vector.load %arg3[%c1_15, %c0_16, %c0_17] : memref<3x16x24xbf16, #tpu.memory_space<vmem>>, vector<1x16x24xbf16>
    %44 = vector.shape_cast %43 : vector<1x16x24xbf16> to vector<16x24xbf16>
    %cst_18 = arith.constant dense<0.000000e+00> : vector<16x256xf32>
    %45 = tpu.matmul %44, %42, %cst_18 {dimension_numbers = #tpu.dot_dimension_numbers<[1], [0], [0], [1], [0, 0, 1, 1], [], []>} : vector<16x24xbf16>, vector<24x256xbf16>, vector<16x256xf32> -> vector<16x256xf32>
    %46 = arith.addf %31, %45 : vector<16x256xf32>
    %47 = vector.extract_strided_slice %1 {offsets = [0, 15], sizes = [8, 241], strides = [1, 1]} : vector<8x256xbf16> to vector<8x241xbf16>
    %48 = vector.extract_strided_slice %1 {offsets = [0, 0], sizes = [8, 15], strides = [1, 1]} : vector<8x256xbf16> to vector<8x15xbf16>
    %49 = tpu.concatenate %47, %48 in 1 : vector<8x241xbf16>, vector<8x15xbf16> -> vector<8x256xbf16>
    %50 = vector.broadcast %3 : vector<1x256xbf16> to vector<8x256xbf16>
    %51 = arith.mulf %49, %50 : vector<8x256xbf16>
    %52 = vector.extract_strided_slice %1 {offsets = [0, 16], sizes = [8, 240], strides = [1, 1]} : vector<8x256xbf16> to vector<8x240xbf16>
    %53 = vector.extract_strided_slice %1 {offsets = [0, 0], sizes = [8, 16], strides = [1, 1]} : vector<8x256xbf16> to vector<8x16xbf16>
    %54 = tpu.concatenate %52, %53 in 1 : vector<8x240xbf16>, vector<8x16xbf16> -> vector<8x256xbf16>
    %55 = vector.extract_strided_slice %1 {offsets = [0, 17], sizes = [8, 239], strides = [1, 1]} : vector<8x256xbf16> to vector<8x239xbf16>
    %56 = vector.extract_strided_slice %1 {offsets = [0, 0], sizes = [8, 17], strides = [1, 1]} : vector<8x256xbf16> to vector<8x17xbf16>
    %57 = tpu.concatenate %55, %56 in 1 : vector<8x239xbf16>, vector<8x17xbf16> -> vector<8x256xbf16>
    %58 = vector.broadcast %5 : vector<1x256xbf16> to vector<8x256xbf16>
    %59 = arith.mulf %57, %58 : vector<8x256xbf16>
    %60 = tpu.concatenate %51, %54, %59 in 0 : vector<8x256xbf16>, vector<8x256xbf16>, vector<8x256xbf16> -> vector<24x256xbf16>
    %c2_19 = arith.constant 2 : index
    %c0_20 = arith.constant 0 : index
    %c0_21 = arith.constant 0 : index
    %61 = vector.load %arg3[%c2_19, %c0_20, %c0_21] : memref<3x16x24xbf16, #tpu.memory_space<vmem>>, vector<1x16x24xbf16>
    %62 = vector.shape_cast %61 : vector<1x16x24xbf16> to vector<16x24xbf16>
    %cst_22 = arith.constant dense<0.000000e+00> : vector<16x256xf32>
    %63 = tpu.matmul %62, %60, %cst_22 {dimension_numbers = #tpu.dot_dimension_numbers<[1], [0], [0], [1], [0, 0, 1, 1], [], []>} : vector<16x24xbf16>, vector<24x256xbf16>, vector<16x256xf32> -> vector<16x256xf32>
    %64 = arith.extf %9 : vector<1x256xbf16> to vector<1x256xf32>
    %65 = vector.broadcast %64 : vector<1x256xf32> to vector<16x256xf32>
    %66 = arith.mulf %63, %65 : vector<16x256xf32>
    %67 = arith.addf %46, %66 : vector<16x256xf32>
    %c0_23 = arith.constant 0 : index
    %c0_24 = arith.constant 0 : index
    %68 = vector.load %arg6[%c0_23, %c0_24] : memref<16x4xf32, #tpu.memory_space<vmem>>, vector<16x4xf32>
    %69 = vector.extract_strided_slice %68 {offsets = [0, 0], sizes = [16, 1], strides = [1, 1]} : vector<16x4xf32> to vector<16x1xf32>
    %70 = vector.broadcast %69 : vector<16x1xf32> to vector<16x256xf32>
    %71 = arith.addf %67, %70 : vector<16x256xf32>
    %cst_25 = arith.constant dense<0.000000e+00> : vector<16xf32>
    %72 = vector.multi_reduction <add>, %71, %cst_25 [1] : vector<16x256xf32> to vector<16xf32>
    %73 = vector.shape_cast %72 : vector<16xf32> to vector<16x1xf32>
    %74 = arith.mulf %71, %71 : vector<16x256xf32>
    %cst_26 = arith.constant dense<0.000000e+00> : vector<16xf32>
    %75 = vector.multi_reduction <add>, %74, %cst_26 [1] : vector<16x256xf32> to vector<16xf32>
    %76 = vector.shape_cast %75 : vector<16xf32> to vector<16x1xf32>
    %c0_27 = arith.constant 0 : index
    %c0_28 = arith.constant 0 : index
    %77 = vector.load %arg5[%c0_27, %c0_28] : memref<16x16xf32, #tpu.memory_space<vmem>>, vector<16x16xf32>
    %78 = tpu.concatenate %73, %76 in 1 : vector<16x1xf32>, vector<16x1xf32> -> vector<16x2xf32>
    %cst_29 = arith.constant dense<0.000000e+00> : vector<16x2xf32>
    %79 = tpu.matmul %77, %78, %cst_29 {dimension_numbers = #tpu.dot_dimension_numbers<[1], [0], [0], [1], [0, 0, 1, 1], [], []>} : vector<16x16xf32>, vector<16x2xf32>, vector<16x2xf32> -> vector<16x2xf32>
    %80 = vector.extract_strided_slice %79 {offsets = [0, 0], sizes = [16, 1], strides = [1, 1]} : vector<16x2xf32> to vector<16x1xf32>
    %81 = vector.extract_strided_slice %79 {offsets = [0, 1], sizes = [16, 1], strides = [1, 1]} : vector<16x2xf32> to vector<16x1xf32>
    %82 = arith.mulf %80, %80 : vector<16x1xf32>
    %83 = arith.subf %81, %82 : vector<16x1xf32>
    %84 = vector.broadcast %80 : vector<16x1xf32> to vector<16x256xf32>
    %85 = arith.subf %71, %84 : vector<16x256xf32>
    %cst_30 = arith.constant 9.99999974E-6 : f32
    %86 = vector.broadcast %cst_30 : f32 to vector<16x1xf32>
    %87 = arith.addf %83, %86 : vector<16x1xf32>
    %88 = math.rsqrt %87 : vector<16x1xf32>
    %89 = vector.broadcast %88 : vector<16x1xf32> to vector<16x256xf32>
    %90 = arith.mulf %85, %89 : vector<16x256xf32>
    %91 = vector.extract_strided_slice %68 {offsets = [0, 1], sizes = [16, 1], strides = [1, 1]} : vector<16x4xf32> to vector<16x1xf32>
    %92 = vector.broadcast %91 : vector<16x1xf32> to vector<16x256xf32>
    %93 = arith.mulf %90, %92 : vector<16x256xf32>
    %94 = vector.extract_strided_slice %68 {offsets = [0, 2], sizes = [16, 1], strides = [1, 1]} : vector<16x4xf32> to vector<16x1xf32>
    %95 = vector.broadcast %94 : vector<16x1xf32> to vector<16x256xf32>
    %96 = arith.addf %93, %95 : vector<16x256xf32>
    %c0_31 = arith.constant 0 : index
    %c0_32 = arith.constant 0 : index
    %c0_33 = arith.constant 0 : index
    %97 = vector.load %arg7[%c0_31, %c0_32, %c0_33] : memref<1x16x2xf32, #tpu.memory_space<vmem>>, vector<1x16x2xf32>
    %98 = vector.shape_cast %97 : vector<1x16x2xf32> to vector<16x2xf32>
    %99 = vector.extract_strided_slice %98 {offsets = [0, 0], sizes = [16, 1], strides = [1, 1]} : vector<16x2xf32> to vector<16x1xf32>
    %cst_34 = arith.constant 1.000000e+00 : f32
    %100 = vector.broadcast %cst_34 : f32 to vector<16x1xf32>
    %101 = arith.addf %99, %100 : vector<16x1xf32>
    %102 = vector.broadcast %101 : vector<16x1xf32> to vector<16x256xf32>
    %103 = arith.mulf %96, %102 : vector<16x256xf32>
    %104 = vector.extract_strided_slice %98 {offsets = [0, 1], sizes = [16, 1], strides = [1, 1]} : vector<16x2xf32> to vector<16x1xf32>
    %105 = vector.broadcast %104 : vector<16x1xf32> to vector<16x256xf32>
    %106 = arith.addf %103, %105 : vector<16x256xf32>
    %107 = arith.negf %106 : vector<16x256xf32>
    %108 = math.exp %107 : vector<16x256xf32>
    %cst_35 = arith.constant 1.000000e+00 : f32
    %109 = vector.broadcast %cst_35 : f32 to vector<16x256xf32>
    %110 = arith.addf %109, %108 : vector<16x256xf32>
    %111 = arith.divf %109, %110 : vector<16x256xf32>
    %112 = arith.mulf %106, %111 : vector<16x256xf32>
    %113 = arith.truncf %112 : vector<16x256xf32> to vector<16x256xbf16>
    %c0_36 = arith.constant 0 : index
    %c0_37 = arith.constant 0 : index
    %c0_38 = arith.constant 0 : index
    %114 = vector.load %arg8[%c0_36, %c0_37, %c0_38] : memref<1x16x256xbf16, #tpu.memory_space<vmem>>, vector<1x16x256xbf16>
    %115 = vector.shape_cast %114 : vector<1x16x256xbf16> to vector<16x256xbf16>
    %116 = vector.shape_cast %113 : vector<16x256xbf16> to vector<1x16x256xbf16>
    tpu.vector_store %arg8[%c0_36, %c0_37, %c0_38], %116 {strides = array<i32>} : memref<1x16x256xbf16, #tpu.memory_space<vmem>>, vector<1x16x256xbf16>,
    return
  }
  func.func @transform_0(%arg0: i32, %arg1: i32) -> (i32, i32, i32) {
    %c0_i32 = arith.constant 0 : i32
    %c0_i32_0 = arith.constant 0 : i32
    %c0_i32_1 = arith.constant 0 : i32
    return %arg0, %c0_i32, %c0_i32_0 : i32, i32, i32
  }
  func.func @transform_1(%arg0: i32, %arg1: i32) -> (i32, i32, i32) {
    %c0_i32 = arith.constant 0 : i32
    %c0_i32_0 = arith.constant 0 : i32
    %c0_i32_1 = arith.constant 0 : i32
    return %c0_i32, %arg1, %c0_i32_0 : i32, i32, i32
  }
  func.func @transform_2(%arg0: i32, %arg1: i32) -> (i32, i32, i32) {
    %c0_i32 = arith.constant 0 : i32
    %c0_i32_0 = arith.constant 0 : i32
    %c0_i32_1 = arith.constant 0 : i32
    %c0_i32_2 = arith.constant 0 : i32
    return %c0_i32, %c0_i32_0, %c0_i32_1 : i32, i32, i32
  }
  func.func @transform_3(%arg0: i32, %arg1: i32) -> (i32, i32) {
    %c0_i32 = arith.constant 0 : i32
    %c0_i32_0 = arith.constant 0 : i32
    %c0_i32_1 = arith.constant 0 : i32
    return %c0_i32, %c0_i32_0 : i32, i32
  }
  func.func @transform_4(%arg0: i32, %arg1: i32) -> (i32, i32) {
    %c0_i32 = arith.constant 0 : i32
    %c0_i32_0 = arith.constant 0 : i32
    return %arg1, %c0_i32 : i32, i32
  }
  func.func @transform_5(%arg0: i32, %arg1: i32) -> (i32, i32, i32) {
    %c0_i32 = arith.constant 0 : i32
    %c0_i32_0 = arith.constant 0 : i32
    return %arg0, %arg1, %c0_i32 : i32, i32, i32
  }
  func.func @transform_6(%arg0: i32, %arg1: i32) -> (i32, i32, i32) {
    %c0_i32 = arith.constant 0 : i32
    %c0_i32_0 = arith.constant 0 : i32
    return %arg0, %arg1, %c0_i32 : i32, i32, i32
  }
}

</mosaic_0001>

<llo_original>
// kernel: tpu_custom_call.1
$region0: #{tpu_custom_call.1}
  #allocation0 [shape = 'u32[]', space=smem, size = 0x4, offset = 0x4, fixed_abs, tag = 'smem constant byte address 0x4 - core index']
  #allocation1 [shape = 'u32[144,128]{1,0:T(1,128)}', space=vmem, size = 0x12000, scoped, tag = 'internal scratch']
  %s0 = inlined_call_operand.hbm [shape: f32[8,128], index: 0, kind: input, shape index: {}]
  %s1 = inlined_call_operand.hbm [shape: f32[8,128], index: 1, kind: output, shape index: {}]
  %s2 = sld [smem:[#allocation0]]
  $region18: #{tpu_custom_call.1} parent=0
    _
  %s4 = ssub.s32 1, %s2
  %s5 = scalar_select 0, %s4, %s2
  $region1: #{tpu_custom_call.1} parent=0
    #allocation2 [shape = 'u8[4096]{0}', space=vmem, size = 0x1000, scoped, tag = 'input window, operand 0, single buffered']
    #allocation3 [shape = 's32[1]{0}', space=sflag, size = 0x4, scoped, tag = 'scoped memory for tpu_custom_call.1']
    #allocation4 [shape = 's32[1]{0}', space=sflag, size = 0x4, scoped, tag = 'scoped memory for tpu_custom_call.1']
    #allocation5 [shape = 'u8[4096]{0}', space=vmem, size = 0x1000, scoped, tag = 'output window, operand 0, single buffered']
    %6 = vsyncpa [#allocation3], 0
    %7 = vsyncpa [#allocation4], 0
    // Predicated region
    $region2: #{tpu_custom_call.1} parent=1 // pred_check
      _
    $region3: #{tpu_custom_call.1} parent=1 // pred_check_branch
      %9 = sbr.rel (0) target = $region5
    $region4: #{tpu_custom_call.1} parent=1 // pred_region
      %s11 = ssub.s32 128, 128
      %12 = vsyncadd [#allocation3], %s11
      %s14 = sshll.u32 [#allocation2], 4
      %s15 = int_to_ptr.vmem [resolvable:$true] %s14
      %17 = dma.hbm_to_vmem [thread:$0]  %s0, 128, %s15, [#allocation3]
    $region5: #{tpu_custom_call.1} parent=1 // pred_fallthru
      _
    // Predicated region
    $region6: #{tpu_custom_call.1} parent=1 // pred_check
      _
    $region7: #{tpu_custom_call.1} parent=1 // pred_check_branch
      %19 = sbr.rel (0) target = $region9
    $region8: #{tpu_custom_call.1} parent=1 // pred_region
      %20 = dma.done [#allocation3], 128
    $region9: #{tpu_custom_call.1} parent=1 // pred_fallthru
      _
    %v21 = vld [vmem:[#allocation2] sm:$0xff]
    %22 = vrot.lane.b32.xlu0 %v21, 1
    %v23 = vpop.permute.xlu0 %22
    %24 = vst [vmem:[#allocation5] sm:$0xff] %v23
    // Predicated region
    $region10: #{tpu_custom_call.1} parent=1 // pred_check
      _
    $region11: #{tpu_custom_call.1} parent=1 // pred_check_branch
      %26 = sbr.rel (0) target = $region13
    $region12: #{tpu_custom_call.1} parent=1 // pred_region
      %s28 = ssub.s32 128, 128
      %29 = vsyncadd [#allocation4], %s28
      %s31 = sshll.u32 [#allocation5], 4
      %s32 = int_to_ptr.vmem [resolvable:$true] %s31
      %34 = dma.vmem_to_hbm [thread:$0]  %s32, 128, %s1, [#allocation4]
    $region13: #{tpu_custom_call.1} parent=1 // pred_fallthru
      _
    // Predicated region
    $region14: #{tpu_custom_call.1} parent=1 // pred_check
      _
    $region15: #{tpu_custom_call.1} parent=1 // pred_check_branch
      %36 = sbr.rel (0) target = $region17
    $region16: #{tpu_custom_call.1} parent=1 // pred_region
      %37 = dma.done [#allocation4], 128
    $region17: #{tpu_custom_call.1} parent=1 // pred_fallthru
      _
    %38 = vsyncpa [#allocation3], 1
    %39 = vsyncpa [#allocation4], 1

// kernel: tpu_custom_call.1
$region0: #{tpu_custom_call.1}
  #allocation0 [shape = 'u32[]', space=smem, size = 0x4, offset = 0x4, fixed_abs, tag = 'smem constant byte address 0x4 - core index']
  #allocation1 [shape = 'u32[144,128]{1,0:T(1,128)}', space=vmem, size = 0x12000, scoped, tag = 'internal scratch']
  #allocation13 [shape = 's32[]', space=sflag, size = 0x4, offset = 0, fixed_abs, tag = 'sflag constant byte address 0x0 - dummy sync flag']
  %s0 = inlined_call_operand.hbm [shape: bf16[2,8,256], index: 0, kind: input, shape index: {}]
  %s1 = inlined_call_operand.hbm [shape: bf16[3,32,24], index: 1, kind: input, shape index: {}]
  %s2 = inlined_call_operand.hbm [shape: bf16[5,1,256], index: 2, kind: input, shape index: {}]
  %s3 = inlined_call_operand.hbm [shape: f32[16,16], index: 3, kind: input, shape index: {}]
  %s4 = inlined_call_operand.hbm [shape: f32[32,4], index: 4, kind: input, shape index: {}]
  %s5 = inlined_call_operand.hbm [shape: f32[2,32,2], index: 5, kind: input, shape index: {}]
  %s6 = inlined_call_operand.hbm [shape: bf16[2,32,256], index: 6, kind: output, shape index: {}]
  %s7 = sld [smem:[#allocation0]]
  $region81: #{tpu_custom_call.1} parent=0
    _
  %s9 = ssub.s32 1, %s7
  %s10 = scalar_select 0, %s9, %s7
  $region1: #{tpu_custom_call.1} parent=0
    #allocation2 [shape = 'u8[8192]{0}', space=vmem, size = 0x2000, scoped, tag = 'input window, operand 0']
    #allocation3 [shape = 's32[2]{0}', space=sflag, size = 0x8, scoped, tag = 'scoped memory for tpu_custom_call.1']
    #allocation4 [shape = 's32[2]{0}', space=sflag, size = 0x8, scoped, tag = 'scoped memory for tpu_custom_call.1']
    #allocation5 [shape = 'u8[24576]{0}', space=vmem, size = 0x6000, scoped, tag = 'input window, operand 1']
    #allocation6 [shape = 's32[2]{0}', space=sflag, size = 0x8, scoped, tag = 'scoped memory for tpu_custom_call.1']
    #allocation7 [shape = 'u8[5120]{0}', space=vmem, size = 0x1400, scoped, tag = 'input window, operand 2, single buffered']
    #allocation8 [shape = 'u8[8192]{0}', space=vmem, size = 0x2000, scoped, tag = 'input window, operand 3, single buffered']
    #allocation9 [shape = 's32[1]{0}', space=sflag, size = 0x4, scoped, tag = 'scoped memory for tpu_custom_call.1']
    #allocation10 [shape = 'u8[16384]{0}', space=vmem, size = 0x4000, scoped, tag = 'input window, operand 4']
    #allocation11 [shape = 'u8[16384]{0}', space=vmem, size = 0x4000, scoped, tag = 'input window, operand 5']
    #allocation12 [shape = 'u8[16384]{0}', space=vmem, size = 0x4000, scoped, tag = 'output window, operand 0']
    %11 = vsyncpa [#allocation3], 0
    %s12 = scalar_lea.sflag [#allocation3], 1
    %13 = vsyncpa %s12, 0
    %14 = vsyncpa [#allocation6], 0
    %s15 = scalar_lea.sflag [#allocation6], 1
    %16 = vsyncpa %s15, 0
    %17 = vsyncpa [#allocation9], 0
    %18 = vsyncpa [#allocation4], 0
    %s19 = scalar_lea.sflag [#allocation4], 1
    %20 = vsyncpa %s19, 0
    loop: start=0, step=1, limit=6
    $region2: #{tpu_custom_call.1} parent=1 // loop_pre_header
      _
    $region3: #{tpu_custom_call.1} parent=1 // loop_header
      %s22 = sphi 0, %s26
      %p23 = scmp.ge.s32.totalorder %s22, 6
      %s29 = sphi 0, %s41
      %s30 = sphi 0, %s37
      %s31 = sphi 0, %s29
      %s32 = sphi 0, %s30
      %s33 = sphi 0, %s31
      %s34 = sphi 0, %s32
      %s44 = sphi 0, %s46
      %s47 = sphi 0, %s44
      %s48 = sphi 0, %s47
      %s64 = sphi 0, %s48
      %s70 = sphi 0, %s72
      %s73 = sphi 0, %s70
      %s74 = sphi 0, %s73
      %s90 = sphi 0, %s74
      %s94 = sphi 0, %s94
      %s96 = sphi 0, %s94
      %s97 = sphi 0, %s96
      %s111 = sphi 0, %s97
      %s115 = sphi 0, %s115
      %s117 = sphi 0, %s115
      %s118 = sphi 0, %s117
      %s132 = sphi 0, %s118
      %s138 = sphi 0, %s140
      %s141 = sphi 0, %s138
      %s142 = sphi 0, %s141
      %s158 = sphi 0, %s142
      %s166 = sphi 0, %s168
      %s169 = sphi 0, %s166
      %s170 = sphi 0, %s169
      %s186 = sphi 0, %s170
      %s194 = sphi 0, %s196
      %s197 = sphi 0, %s194
      %s198 = sphi 0, %s197
      %s214 = sphi 0, %s198
    $region4: #{tpu_custom_call.1} parent=1 // loop_header_branch
      %25 = sbr.rel (%p23) target = $region8
    $region5: #{tpu_custom_call.1} parent=1 // loop_body
      %s27 = ssub.s32 %s22, 1
      %s28 = ssub.s32 %s22, 2
      %s35 = sadd.s32 1, %s30
      %p36 = scmp.ge.s32.totalorder %s35, 2
      %s37 = scalar_select %p36, 0, %s35
      %s38 = sadd.s32 1, %s29
      %s39 = scalar_select %p36, %s38, %s29
      %p40 = scmp.ge.s32.totalorder %s39, 2
      %s41 = scalar_select %p40, 0, %s39
      %s42 = ssub.s32 %s29, %s41
      %p43 = scmp.eq.s32.totalorder %s42, 0
      %s45 = sadd.s32 %s44, 1
      %s46 = scalar_select %p43, %s44, %s45
      %p49 = pneg %p43
      %p50 = scmp.eq.s32.totalorder %s22, 3
      %p51 = por %p49, %p50
      %p52 = scmp.ne.s32.totalorder %s44, %s47
      %p53 = scmp.eq.s32.totalorder %s22, 0
      %p54 = por %p52, %p53
      %p55 = scmp.ne.s32.totalorder %s44, %s47
      %p56 = scmp.eq.s32.totalorder %s27, 3
      %p57 = por %p55, %p56
      %p58 = scmp.ne.s32.totalorder %s47, %s48
      %p59 = scmp.eq.s32.totalorder %s27, 0
      %p60 = por %p58, %p59
      %p61 = scmp.ne.s32.totalorder %s47, %s48
      %p62 = scmp.eq.s32.totalorder %s28, 3
      %p63 = por %p61, %p62
      %p65 = scmp.ne.s32.totalorder %s48, %s64
      %p66 = scmp.eq.s32.totalorder %s28, 0
      %p67 = por %p65, %p66
      %s68 = ssub.s32 %s30, %s37
      %p69 = scmp.eq.s32.totalorder %s68, 0
      %s71 = sadd.s32 %s70, 1
      %s72 = scalar_select %p69, %s70, %s71
      %p75 = pneg %p69
      %p76 = scmp.eq.s32.totalorder %s22, 3
      %p77 = por %p75, %p76
      %p78 = scmp.ne.s32.totalorder %s70, %s73
      %p79 = scmp.eq.s32.totalorder %s22, 0
      %p80 = por %p78, %p79
      %p81 = scmp.ne.s32.totalorder %s70, %s73
      %p82 = scmp.eq.s32.totalorder %s27, 3
      %p83 = por %p81, %p82
      %p84 = scmp.ne.s32.totalorder %s73, %s74
      %p85 = scmp.eq.s32.totalorder %s27, 0
      %p86 = por %p84, %p85
      %p87 = scmp.ne.s32.totalorder %s73, %s74
      %p88 = scmp.eq.s32.totalorder %s28, 3
      %p89 = por %p87, %p88
      %p91 = scmp.ne.s32.totalorder %s74, %s90
      %p92 = scmp.eq.s32.totalorder %s28, 0
      %p93 = por %p91, %p92
      %s95 = sadd.s32 %s94, 1
      %p98 = scmp.eq.s32.totalorder %s22, 3
      %p99 = scmp.ne.s32.totalorder %s94, %s96
      %p100 = scmp.eq.s32.totalorder %s22, 0
      %p101 = por %p99, %p100
      %p102 = scmp.ne.s32.totalorder %s94, %s96
      %p103 = scmp.eq.s32.totalorder %s27, 3
      %p104 = por %p102, %p103
      %p105 = scmp.ne.s32.totalorder %s96, %s97
      %p106 = scmp.eq.s32.totalorder %s27, 0
      %p107 = por %p105, %p106
      %p108 = scmp.ne.s32.totalorder %s96, %s97
      %p109 = scmp.eq.s32.totalorder %s28, 3
      %p110 = por %p108, %p109
      %p112 = scmp.ne.s32.totalorder %s97, %s111
      %p113 = scmp.eq.s32.totalorder %s28, 0
      %p114 = por %p112, %p113
      %s116 = sadd.s32 %s115, 1
      %p119 = scmp.eq.s32.totalorder %s22, 3
      %p120 = scmp.ne.s32.totalorder %s115, %s117
      %p121 = scmp.eq.s32.totalorder %s22, 0
      %p122 = por %p120, %p121
      %p123 = scmp.ne.s32.totalorder %s115, %s117
      %p124 = scmp.eq.s32.totalorder %s27, 3
      %p125 = por %p123, %p124
      %p126 = scmp.ne.s32.totalorder %s117, %s118
      %p127 = scmp.eq.s32.totalorder %s27, 0
      %p128 = por %p126, %p127
      %p129 = scmp.ne.s32.totalorder %s117, %s118
      %p130 = scmp.eq.s32.totalorder %s28, 3
      %p131 = por %p129, %p130
      %p133 = scmp.ne.s32.totalorder %s118, %s132
      %p134 = scmp.eq.s32.totalorder %s28, 0
      %p135 = por %p133, %p134
      %s136 = ssub.s32 %s30, %s37
      %p137 = scmp.eq.s32.totalorder %s136, 0
      %s139 = sadd.s32 %s138, 1
      %s140 = scalar_select %p137, %s138, %s139
      %p143 = pneg %p137
      %p144 = scmp.eq.s32.totalorder %s22, 3
      %p145 = por %p143, %p144
      %p146 = scmp.ne.s32.totalorder %s138, %s141
      %p147 = scmp.eq.s32.totalorder %s22, 0
      %p148 = por %p146, %p147
      %p149 = scmp.ne.s32.totalorder %s138, %s141
      %p150 = scmp.eq.s32.totalorder %s27, 3
      %p151 = por %p149, %p150
      %p152 = scmp.ne.s32.totalorder %s141, %s142
      %p153 = scmp.eq.s32.totalorder %s27, 0
      %p154 = por %p152, %p153
      %p155 = scmp.ne.s32.totalorder %s141, %s142
      %p156 = scmp.eq.s32.totalorder %s28, 3
      %p157 = por %p155, %p156
      %p159 = scmp.ne.s32.totalorder %s142, %s158
      %p160 = scmp.eq.s32.totalorder %s28, 0
      %p161 = por %p159, %p160
      %s162 = ssub.s32 %s29, %s41
      %s163 = ssub.s32 %s30, %s37
      %s164 = sor.u32 %s162, %s163
      %p165 = scmp.eq.s32.totalorder %s164, 0
      %s167 = sadd.s32 %s166, 1
      %s168 = scalar_select %p165, %s166, %s167
      %p171 = pneg %p165
      %p172 = scmp.eq.s32.totalorder %s22, 3
      %p173 = por %p171, %p172
      %p174 = scmp.ne.s32.totalorder %s166, %s169
      %p175 = scmp.eq.s32.totalorder %s22, 0
      %p176 = por %p174, %p175
      %p177 = scmp.ne.s32.totalorder %s166, %s169
      %p178 = scmp.eq.s32.totalorder %s27, 3
      %p179 = por %p177, %p178
      %p180 = scmp.ne.s32.totalorder %s169, %s170
      %p181 = scmp.eq.s32.totalorder %s27, 0
      %p182 = por %p180, %p181
      %p183 = scmp.ne.s32.totalorder %s169, %s170
      %p184 = scmp.eq.s32.totalorder %s28, 3
      %p185 = por %p183, %p184
      %p187 = scmp.ne.s32.totalorder %s170, %s186
      %p188 = scmp.eq.s32.totalorder %s28, 0
      %p189 = por %p187, %p188
      %s190 = ssub.s32 %s29, %s41
      %s191 = ssub.s32 %s30, %s37
      %s192 = sor.u32 %s190, %s191
      %p193 = scmp.eq.s32.totalorder %s192, 0
      %s195 = sadd.s32 %s194, 1
      %s196 = scalar_select %p193, %s194, %s195
      %p199 = pneg %p193
      %p200 = scmp.eq.s32.totalorder %s22, 3
      %p201 = por %p199, %p200
      %p202 = scmp.ne.s32.totalorder %s194, %s197
      %p203 = scmp.eq.s32.totalorder %s22, 0
      %p204 = por %p202, %p203
      %p205 = scmp.ne.s32.totalorder %s194, %s197
      %p206 = scmp.eq.s32.totalorder %s27, 3
      %p207 = por %p205, %p206
      %p208 = scmp.ne.s32.totalorder %s197, %s198
      %p209 = scmp.eq.s32.totalorder %s27, 0
      %p210 = por %p208, %p209
      %p211 = scmp.ne.s32.totalorder %s197, %s198
      %p212 = scmp.eq.s32.totalorder %s28, 3
      %p213 = por %p211, %p212
      %p215 = scmp.ne.s32.totalorder %s198, %s214
      %p216 = scmp.eq.s32.totalorder %s28, 0
      %p217 = por %p215, %p216
      %p218 = scmp.le.s32.totalorder 1, %s22
      %p219 = scmp.lt.s32.totalorder %s22, 5
      %p220 = pnand %p218, %p219
      %p221 = pneg %p220
      // Predicated region
      $region9: #{tpu_custom_call.1} parent=5 // pred_check
        _
      $region10: #{tpu_custom_call.1} parent=5 // pred_check_branch
        %223 = sbr.rel (%p220) target = $region12
      $region11: #{tpu_custom_call.1} parent=5 // pred_region
        %s224 = ssub.s32 %s22, 1
        // Predicated region
        $region13: #{tpu_custom_call.1} parent=11 // pred_check
          %p225 = pneg %p107
        $region14: #{tpu_custom_call.1} parent=11 // pred_check_branch
          %227 = sbr.rel (%p225) target = $region16
        $region15: #{tpu_custom_call.1} parent=11 // pred_region
          %s229 = ssub.s32 160, 160
          %230 = vsyncadd [#allocation6], %s229
          %s231 = sshll.u32 [#allocation7], 4
          %s232 = int_to_ptr.vmem [resolvable:$true] %s231
          %237 = dma.hbm_to_vmem [thread:$0]  %s2, 160, %s232, [#allocation6], 32, 32, 2
        $region16: #{tpu_custom_call.1} parent=11 // pred_fallthru
          _
        // Predicated region
        $region17: #{tpu_custom_call.1} parent=11 // pred_check
          %p238 = pneg %p128
        $region18: #{tpu_custom_call.1} parent=11 // pred_check_branch
          %240 = sbr.rel (%p238) target = $region20
        $region19: #{tpu_custom_call.1} parent=11 // pred_region
          %s242 = ssub.s32 256, 256
          %243 = vsyncadd [#allocation9], %s242
          %s244 = sshll.u32 [#allocation8], 4
          %s245 = int_to_ptr.vmem [resolvable:$true] %s244
          %250 = dma.hbm_to_vmem [thread:$0]  %s3, 256, %s245, [#allocation9], 128, 128, 8
        $region20: #{tpu_custom_call.1} parent=11 // pred_fallthru
          _
      $region12: #{tpu_custom_call.1} parent=5 // pred_fallthru
        _
      %p251 = scmp.lt.s32.totalorder %s22, 4
      // Predicated region
      $region21: #{tpu_custom_call.1} parent=5 // pred_check
        %p252 = pneg %p251
      $region22: #{tpu_custom_call.1} parent=5 // pred_check_branch
        %254 = sbr.rel (%p252) target = $region24
      $region23: #{tpu_custom_call.1} parent=5 // pred_region
        // Predicated region
        $region25: #{tpu_custom_call.1} parent=23 // pred_check
          %p255 = pneg %p54
        $region26: #{tpu_custom_call.1} parent=23 // pred_check_branch
          %257 = sbr.rel (%p255) target = $region28
        $region27: #{tpu_custom_call.1} parent=23 // pred_region
          %s258 = sand.u32 %s22, 1
          %s259 = scalar_lea.sflag [#allocation3], %s258
          %s260 = sand.u32 %s44, 1
          %s261 = smul.addr %s260, 8
          %s262 = scalar_lea.vmem [#allocation2], %s261
          %s264 = ssub.s32 128, 128
          %265 = vsyncadd %s259, %s264
          %s266 = smul.addr %s29, 2
          %s267 = smul.addr %s266, 64
          %s268 = scalar_lea.hbm %s0, %s267
          %s270 = sshll.u32 %s262, 4
          %s271 = int_to_ptr.vmem [resolvable:$true] %s270
          %273 = dma.hbm_to_vmem [thread:$0]  %s268, 128, %s271, %s259
        $region28: #{tpu_custom_call.1} parent=23 // pred_fallthru
          _
        // Predicated region
        $region29: #{tpu_custom_call.1} parent=23 // pred_check
          %p274 = pneg %p80
        $region30: #{tpu_custom_call.1} parent=23 // pred_check_branch
          %276 = sbr.rel (%p274) target = $region32
        $region31: #{tpu_custom_call.1} parent=23 // pred_region
          #allocation14 [shape = 'u32[6]{0}', space=smem, size = 0x18, scoped, tag = 'DMA stride descriptor']
          %s277 = sand.u32 %s22, 1
          %s278 = scalar_lea.sflag [#allocation6], %s277
          %s279 = sand.u32 %s70, 1
          %s280 = smul.addr %s279, 24
          %s281 = scalar_lea.vmem [#allocation5], %s280
          %s282 = smul.u32 2, %s30
          %s284 = ssub.s32 384, 384
          %285 = vsyncadd %s278, %s284
          %s286 = smul.addr %s282, 64
          %s287 = scalar_lea.hbm %s1, %s286
          %s289 = sshll.u32 1, 14
          %s290 = sxor.u32 4294967295, %s289
          %s292 = sld [smem:[#allocation0]]
          %s293 = sadd.s32 2, %s292
          %s295 = sshll.u32 7, 26
          %s296 = sxor.u32 4294967295, %s295
          %s297 = sand.u32 0, %s296
          %s298 = sshll.u32 %s293, 26
          %s299 = sor.u32 %s297, %s298
          %s300 = sshll.u32 %s281, 4
          %s301 = int_to_ptr.vmem [resolvable:$true] %s300
          %307 = sst [smem:[#allocation14]] 256
          %s308 = scalar_lea.smem [#allocation14], 1
          %309 = sst [smem:[%s308]] 128
          %s310 = scalar_lea.smem [#allocation14], 2
          %311 = sst [smem:[%s310]] 2
          %s312 = scalar_lea.smem [#allocation14], 3
          %313 = sst [smem:[%s312]] 64
          %s314 = scalar_lea.smem [#allocation14], 4
          %315 = sst [smem:[%s314]] 64
          %s316 = scalar_lea.smem [#allocation14], 5
          %317 = sst [smem:[%s316]] 4
          %319 = dma.general %s287, 384, %s301, %s278, [#allocation13], [#allocation14], %s299, 0
        $region32: #{tpu_custom_call.1} parent=23 // pred_fallthru
          _
        // Predicated region
        $region33: #{tpu_custom_call.1} parent=23 // pred_check
          %p320 = pneg %p148
        $region34: #{tpu_custom_call.1} parent=23 // pred_check_branch
          %322 = sbr.rel (%p320) target = $region36
        $region35: #{tpu_custom_call.1} parent=23 // pred_region
          %s323 = sand.u32 %s22, 1
          %s324 = scalar_lea.sflag [#allocation3], %s323
          %s325 = sand.u32 %s138, 1
          %s326 = smul.addr %s325, 16
          %s327 = scalar_lea.vmem [#allocation10], %s326
          %s328 = smul.u32 2, %s30
          %s330 = ssub.s32 256, 256
          %331 = vsyncadd %s324, %s330
          %s332 = smul.addr %s328, 128
          %s333 = scalar_lea.hbm %s4, %s332
          %s334 = sshll.u32 %s327, 4
          %s335 = int_to_ptr.vmem [resolvable:$true] %s334
          %340 = dma.hbm_to_vmem [thread:$0]  %s333, 256, %s335, %s324, 128, 128, 8
        $region36: #{tpu_custom_call.1} parent=23 // pred_fallthru
          _
        // Predicated region
        $region37: #{tpu_custom_call.1} parent=23 // pred_check
          %p341 = pneg %p176
        $region38: #{tpu_custom_call.1} parent=23 // pred_check_branch
          %343 = sbr.rel (%p341) target = $region40
        $region39: #{tpu_custom_call.1} parent=23 // pred_region
          %s344 = sand.u32 %s22, 1
          %s345 = scalar_lea.sflag [#allocation6], %s344
          %s346 = sand.u32 %s166, 1
          %s347 = smul.addr %s346, 16
          %s348 = scalar_lea.vmem [#allocation11], %s347
          %s349 = smul.u32 2, %s30
          %s351 = ssub.s32 256, 256
          %352 = vsyncadd %s345, %s351
          %s353 = smul.addr %s29, 4
          %s354 = sadd.s32 %s349, %s353
          %s355 = smul.addr %s354, 128
          %s356 = scalar_lea.hbm %s5, %s355
          %s357 = sshll.u32 %s348, 4
          %s358 = int_to_ptr.vmem [resolvable:$true] %s357
          %363 = dma.hbm_to_vmem [thread:$0]  %s356, 256, %s358, %s345, 128, 128, 8
        $region40: #{tpu_custom_call.1} parent=23 // pred_fallthru
          _
      $region24: #{tpu_custom_call.1} parent=5 // pred_fallthru
        _
      %p364 = scmp.le.s32.totalorder 1, %s22
      %p365 = scmp.lt.s32.totalorder %s22, 5
      %p366 = pnand %p364, %p365
      %p367 = pneg %p366
      // Predicated region
      $region41: #{tpu_custom_call.1} parent=5 // pred_check
        _
      $region42: #{tpu_custom_call.1} parent=5 // pred_check_branch
        %369 = sbr.rel (%p366) target = $region44
      $region43: #{tpu_custom_call.1} parent=5 // pred_region
        %s370 = ssub.s32 %s22, 1
        %s371 = sand.u32 %s27, 1
        %s372 = scalar_lea.sflag [#allocation3], %s371
        %s373 = sand.u32 %s47, 1
        %s374 = smul.addr %s373, 8
        %s375 = scalar_lea.vmem [#allocation2], %s374
        // Predicated region
        $region45: #{tpu_custom_call.1} parent=43 // pred_check
          %p376 = pneg %p60
        $region46: #{tpu_custom_call.1} parent=43 // pred_check_branch
          %378 = sbr.rel (%p376) target = $region48
        $region47: #{tpu_custom_call.1} parent=43 // pred_region
          %379 = dma.done %s372, 128
        $region48: #{tpu_custom_call.1} parent=43 // pred_fallthru
          _
        %s380 = sand.u32 %s27, 1
        %s381 = scalar_lea.sflag [#allocation6], %s380
        %s382 = sand.u32 %s73, 1
        %s383 = smul.addr %s382, 24
        %s384 = scalar_lea.vmem [#allocation5], %s383
        // Predicated region
        $region49: #{tpu_custom_call.1} parent=43 // pred_check
          %p385 = pneg %p86
        $region50: #{tpu_custom_call.1} parent=43 // pred_check_branch
          %387 = sbr.rel (%p385) target = $region52
        $region51: #{tpu_custom_call.1} parent=43 // pred_region
          %388 = dma.done %s381, 384
        $region52: #{tpu_custom_call.1} parent=43 // pred_fallthru
          _
        // Predicated region
        $region53: #{tpu_custom_call.1} parent=43 // pred_check
          %p389 = pneg %p107
        $region54: #{tpu_custom_call.1} parent=43 // pred_check_branch
          %391 = sbr.rel (%p389) target = $region56
        $region55: #{tpu_custom_call.1} parent=43 // pred_region
          %392 = dma.done [#allocation6], 160
        $region56: #{tpu_custom_call.1} parent=43 // pred_fallthru
          _
        // Predicated region
        $region57: #{tpu_custom_call.1} parent=43 // pred_check
          %p393 = pneg %p128
        $region58: #{tpu_custom_call.1} parent=43 // pred_check_branch
          %395 = sbr.rel (%p393) target = $region60
        $region59: #{tpu_custom_call.1} parent=43 // pred_region
          %396 = dma.done [#allocation9], 256
        $region60: #{tpu_custom_call.1} parent=43 // pred_fallthru
          _
        %s397 = sand.u32 %s27, 1
        %s398 = scalar_lea.sflag [#allocation3], %s397
        %s399 = sand.u32 %s141, 1
        %s400 = smul.addr %s399, 16
        %s401 = scalar_lea.vmem [#allocation10], %s400
        // Predicated region
        $region61: #{tpu_custom_call.1} parent=43 // pred_check
          %p402 = pneg %p154
        $region62: #{tpu_custom_call.1} parent=43 // pred_check_branch
          %404 = sbr.rel (%p402) target = $region64
        $region63: #{tpu_custom_call.1} parent=43 // pred_region
          %405 = dma.done %s398, 256
        $region64: #{tpu_custom_call.1} parent=43 // pred_fallthru
          _
        %s406 = sand.u32 %s27, 1
        %s407 = scalar_lea.sflag [#allocation6], %s406
        %s408 = sand.u32 %s169, 1
        %s409 = smul.addr %s408, 16
        %s410 = scalar_lea.vmem [#allocation11], %s409
        // Predicated region
        $region65: #{tpu_custom_call.1} parent=43 // pred_check
          %p411 = pneg %p182
        $region66: #{tpu_custom_call.1} parent=43 // pred_check_branch
          %413 = sbr.rel (%p411) target = $region68
        $region67: #{tpu_custom_call.1} parent=43 // pred_region
          %414 = dma.done %s407, 256
        $region68: #{tpu_custom_call.1} parent=43 // pred_fallthru
          _
        %s415 = sand.u32 %s27, 1
        %s416 = scalar_lea.sflag [#allocation3], %s415
        %s417 = sand.u32 %s47, 1
        %s418 = smul.addr %s417, 8
        %s419 = scalar_lea.vmem [#allocation2], %s418
        %p420 = pneg %p60
        %p421 = pneg %p57
        %s422 = sand.u32 %s27, 1
        %s423 = scalar_lea.sflag [#allocation6], %s422
        %s424 = sand.u32 %s73, 1
        %s425 = smul.addr %s424, 24
        %s426 = scalar_lea.vmem [#allocation5], %s425
        %p427 = pneg %p86
        %p428 = pneg %p83
        %p429 = pneg %p107
        %p430 = pneg %p104
        %p431 = pneg %p128
        %p432 = pneg %p125
        %s433 = sand.u32 %s27, 1
        %s434 = scalar_lea.sflag [#allocation3], %s433
        %s435 = sand.u32 %s141, 1
        %s436 = smul.addr %s435, 16
        %s437 = scalar_lea.vmem [#allocation10], %s436
        %p438 = pneg %p154
        %p439 = pneg %p151
        %s440 = sand.u32 %s27, 1
        %s441 = scalar_lea.sflag [#allocation6], %s440
        %s442 = sand.u32 %s169, 1
        %s443 = smul.addr %s442, 16
        %s444 = scalar_lea.vmem [#allocation11], %s443
        %p445 = pneg %p182
        %p446 = pneg %p179
        %p447 = pneg %p210
        %p448 = pneg %p207
        %s449 = sand.u32 %s197, 1
        %s450 = scalar_lea.sflag [#allocation4], %s449
        %s451 = sand.u32 %s197, 1
        %s452 = smul.addr %s451, 16
        %s453 = scalar_lea.vmem [#allocation12], %s452
        %s454 = smul.u32 2, %s32
        %s455 = smul.u32 2, %s32
        %s456 = smul.u32 2, %s32
        %s457 = smul.u32 2, %s32
        %v459 = vld [vmem:[%s375] sm:$0xff]
        %v460 = vld [vmem:[#allocation7] sm:$0x3]
        %s461 = scalar_lea.vmem [#allocation7], 2
        %v462 = vld [vmem:[%s461] sm:$0x3]
        %s463 = scalar_lea.vmem [#allocation7], 4
        %v464 = vld [vmem:[%s463] sm:$0x3]
        %s465 = scalar_lea.vmem [#allocation7], 6
        %v466 = vld [vmem:[%s465] sm:$0x3]
        %v468 = vunpack.c.h.b16 %v459
        %v469 = vpack.c.b16 %v468, %v468
        %470 = vrot.lane.b32.xlu0 %v469, 17
        %v471 = vpop.permute.xlu0 %470
        %v472 = vunpack.c.l.b16 %v459
        %v473 = vpack.c.b16 %v472, %v472
        %474 = vrot.lane.b32.xlu0 %v473, 17
        %v475 = vpop.permute.xlu0 %474
        %vm476 = vcmask 138240
        %v477 = vsel %vm476, %v475, %v471
        %vm479 = vcmask 138240
        %v482 = vsel %vm479, %v471, %v475
        %v486 = vunpack.c.l.s4 1966171168
        %v487 = vunpack.c.0.s8 %v486
        %v488 = vlaneseq
        %v489 = vshrl.u32 %v488, 7
        %v490 = vsub.s32 %v487, %v489
        %v491 = vrot.slane %v460, %v490
        %v492 = vcombine.high %v491, %v491
        %v494 = vunpack.c.l.s4 1966171168
        %v495 = vunpack.c.0.s8 %v494
        %v496 = vlaneseq
        %v497 = vshrl.u32 %v496, 7
        %v498 = vsub.s32 %v495, %v497
        %v499 = vrot.slane %v491, %v498
        %v501 = vunpack.c.l.s4 1966171168
        %v502 = vunpack.c.0.s8 %v501
        %v503 = vlaneseq
        %v504 = vshrl.u32 %v503, 7
        %v505 = vsub.s32 %v502, %v504
        %v506 = vrot.slane %v492, %v505
        %v508 = vpack.i.b16 %v499, %v499
        %v510 = vlaneseq
        %v511 = vshrl.u32 %v510, 7
        %v512 = vsub.s32 0, %v511
        %v513 = vrot.slane %v508, %v512
        %v515 = vpack.i.b16 %v506, %v506
        %v517 = vlaneseq
        %v518 = vshrl.u32 %v517, 7
        %v519 = vsub.s32 0, %v518
        %v520 = vrot.slane %v515, %v519
        %v521 = vmul.bf16 %v482, %v513
        %v522 = vmul.bf16 %v477, %v520
        %523 = vrot.lane.b32.xlu0 %v469, 16
        %v524 = vpop.permute.xlu0 %523
        %525 = vrot.lane.b32.xlu0 %v473, 16
        %v526 = vpop.permute.xlu0 %525
        %vm527 = vcmask 130048
        %v528 = vsel %vm527, %v526, %v524
        %vm529 = vcmask 130048
        %v532 = vsel %vm529, %v524, %v526
        %533 = vrot.lane.b32.xlu0 %v469, 15
        %v534 = vpop.permute.xlu0 %533
        %535 = vrot.lane.b32.xlu0 %v473, 15
        %v536 = vpop.permute.xlu0 %535
        %vm537 = vcmask 121856
        %v538 = vsel %vm537, %v536, %v534
        %vm540 = vcmask 121856
        %v543 = vsel %vm540, %v534, %v536
        %v547 = vunpack.c.l.s4 1966171168
        %v548 = vunpack.c.0.s8 %v547
        %v549 = vlaneseq
        %v550 = vshrl.u32 %v549, 7
        %v551 = vsub.s32 %v548, %v550
        %v552 = vrot.slane %v462, %v551
        %v553 = vcombine.high %v552, %v552
        %v555 = vunpack.c.l.s4 1966171168
        %v556 = vunpack.c.0.s8 %v555
        %v557 = vlaneseq
        %v558 = vshrl.u32 %v557, 7
        %v559 = vsub.s32 %v556, %v558
        %v560 = vrot.slane %v552, %v559
        %v562 = vunpack.c.l.s4 1966171168
        %v563 = vunpack.c.0.s8 %v562
        %v564 = vlaneseq
        %v565 = vshrl.u32 %v564, 7
        %v566 = vsub.s32 %v563, %v565
        %v567 = vrot.slane %v553, %v566
        %v569 = vpack.i.b16 %v560, %v560
        %v571 = vlaneseq
        %v572 = vshrl.u32 %v571, 7
        %v573 = vsub.s32 0, %v572
        %v574 = vrot.slane %v569, %v573
        %v576 = vpack.i.b16 %v567, %v567
        %v578 = vlaneseq
        %v579 = vshrl.u32 %v578, 7
        %v580 = vsub.s32 0, %v579
        %v581 = vrot.slane %v576, %v580
        %v582 = vmul.bf16 %v543, %v574
        %v583 = vmul.bf16 %v538, %v581
        %v585 = vrot.slane %v532, 4
        %v586 = vrot.slane %v528, 4
        %vm587 = vcmask 1043456
        %v590 = vsel %vm587, %v521, %v585
        %v594 = vsel %vm587, %v522, %v586
        %v596 = vld [vmem:[%s384] sm:$0xf]
        %v597 = vld [vmem:[%s384 + $0x4] sm:$0xf]
        %v600 = vunpack.c.l.b16 %v596
        %v601 = vunpack.c.l.b16 %v597
        %v602 = vpack.c.b16 %v601, %v600
        %vm603 = vcmask 195584
        %v605 = vsel %vm603, %v602, 0
        %v608 = vsel %vm587, %v582, 0
        %v611 = vsel %vm587, %v583, 0
        %613 = vmatprep.subr.bf16.mxu0 %v594
        %614 = vmatpush1.bf16.msra.mxu0 %v590
        %615 = vmatprep.subr.bf16.mxu0 %v611
        %616 = vmatpush1.bf16.msra.mxu0 %v608
        %617 = vmatprep.subr.bf16.mxu0 0
        %618 = vmatpush1.bf16.msra.mxu0 0
        %619 = vmatprep.subr.bf16.mxu0 0
        %620 = vmatpush1.bf16.msra.mxu0 0
        %621 = vmatprep.subr.bf16.mxu0 0
        %622 = vmatpush1.bf16.msra.mxu0 0
        %623 = vmatprep.subr.bf16.mxu0 0
        %624 = vmatpush1.bf16.msra.mxu0 0
        %625 = vmatprep.subr.bf16.mxu0 0
        %626 = vmatpush1.bf16.msra.mxu0 0
        %627 = vmatprep.subr.bf16.mxu0 0
        %628 = vmatpush1.bf16.msra.mxu0 0
        %629 = vmatprep.subr.bf16.mxu0 0
        %630 = vmatpush1.bf16.msra.mxu0 0
        %631 = vmatprep.subr.bf16.mxu0 0
        %632 = vmatpush1.bf16.msra.mxu0 0
        %633 = vmatprep.subr.bf16.mxu0 0
        %634 = vmatpush1.bf16.msra.mxu0 0
        %635 = vmatprep.subr.bf16.mxu0 0
        %636 = vmatpush1.bf16.msra.mxu0 0
        %637 = vmatprep.subr.bf16.mxu0 0
        %638 = vmatpush1.bf16.msra.mxu0 0
        %639 = vmatprep.subr.bf16.mxu0 0
        %640 = vmatpush1.bf16.msra.mxu0 0
        %641 = vmatprep.subr.bf16.mxu0 0
        %642 = vmatpush1.bf16.msra.mxu0 0
        %643 = vmatprep.subr.bf16.mxu0 0
        %644 = vmatpush1.bf16.msra.mxu0 0
        %645 = vmatprep.mubr.bf16.mxu0 0
        %646 = vmatmul.mubr.bf16.gmra.mrb[0].mxu0 %v605
        %v647 = vpop.f32.mrb[0].mxu0
        %v648 = vadd.f32 0.0, %v647
        %v649 = vpop.f32.mrb[0].mxu0
        %v650 = vadd.f32 0.0, %v649
        %v651 = vpop.f32.mrb[0].mxu0
        %v652 = vadd.f32 0.0, %v651
        %v653 = vpop.f32.mrb[0].mxu0
        %v654 = vadd.f32 0.0, %v653
        %655 = vdwg.mxu0
        %v656 = vunpack.c.l.bf16 %v464
        %v658 = vlaneseq
        %v659 = vshrl.u32 %v658, 7
        %v660 = vsub.s32 0, %v659
        %v661 = vrot.slane %v656, %v660
        %v662 = vlaneseq
        %v663 = vshrl.u32 %v662, 7
        %v664 = vsub.s32 2, %v663
        %v665 = vrot.slane %v656, %v664
        %v668 = vlaneseq
        %v669 = vshrl.u32 %v668, 7
        %v670 = vsub.s32 0, %v669
        %v671 = vrot.slane %v661, %v670
        %v672 = vlaneseq
        %v673 = vshrl.u32 %v672, 7
        %v674 = vsub.s32 0, %v673
        %v675 = vrot.slane %v665, %v674
        %v676 = vmul.f32 %v648, %v671
        %v677 = vmul.f32 %v650, %v675
        %v678 = vmul.f32 %v652, %v671
        %v679 = vmul.f32 %v654, %v675
        %v680 = vadd.f32 %v676, 0.0
        %v681 = vadd.f32 %v677, 0.0
        %v682 = vadd.f32 %v678, 0.0
        %v683 = vadd.f32 %v679, 0.0
        %684 = vrot.lane.b32.xlu0 %v469, 1
        %v685 = vpop.permute.xlu0 %684
        %686 = vrot.lane.b32.xlu0 %v473, 1
        %v687 = vpop.permute.xlu0 %686
        %vm688 = vcmask 7168
        %v689 = vsel %vm688, %v687, %v685
        %vm691 = vcmask 7168
        %v694 = vsel %vm691, %v685, %v687
        %v696 = vmul.bf16 %v694, %v513
        %v697 = vmul.bf16 %v689, %v520
        %698 = vrot.lane.b32.xlu0 %v473, 127
        %v699 = vpop.permute.xlu0 %698
        %700 = vrot.lane.b32.xlu0 %v469, 127
        %v701 = vpop.permute.xlu0 %700
        %vm702 = vcmask 1039360
        %v703 = vsel %vm702, %v699, %v701
        %vm705 = vcmask 1039360
        %v708 = vsel %vm705, %v701, %v699
        %v710 = vmul.bf16 %v703, %v574
        %v711 = vmul.bf16 %v708, %v581
        %v714 = vsel %vm587, %v696, %v473
        %v718 = vsel %vm587, %v697, %v469
        %s720 = scalar_lea.vmem %s384, 8 [#allocation5]
        %v721 = vld [vmem:[%s720] sm:$0xf]
        %v722 = vld [vmem:[%s720 + $0x4] sm:$0xf]
        %v725 = vunpack.c.l.b16 %v721
        %v726 = vunpack.c.l.b16 %v722
        %v727 = vpack.c.b16 %v726, %v725
        %v729 = vsel %vm603, %v727, 0
        %v732 = vsel %vm587, %v710, 0
        %v735 = vsel %vm587, %v711, 0
        %737 = vmatprep.subr.bf16.mxu0 %v718
        %738 = vmatpush1.bf16.msra.mxu0 %v714
        %739 = vmatprep.subr.bf16.mxu0 %v735
        %740 = vmatpush1.bf16.msra.mxu0 %v732
        %741 = vmatprep.subr.bf16.mxu0 0
        %742 = vmatpush1.bf16.msra.mxu0 0
        %743 = vmatprep.subr.bf16.mxu0 0
        %744 = vmatpush1.bf16.msra.mxu0 0
        %745 = vmatprep.subr.bf16.mxu0 0
        %746 = vmatpush1.bf16.msra.mxu0 0
        %747 = vmatprep.subr.bf16.mxu0 0
        %748 = vmatpush1.bf16.msra.mxu0 0
        %749 = vmatprep.subr.bf16.mxu0 0
        %750 = vmatpush1.bf16.msra.mxu0 0
        %751 = vmatprep.subr.bf16.mxu0 0
        %752 = vmatpush1.bf16.msra.mxu0 0
        %753 = vmatprep.subr.bf16.mxu0 0
        %754 = vmatpush1.bf16.msra.mxu0 0
        %755 = vmatprep.subr.bf16.mxu0 0
        %756 = vmatpush1.bf16.msra.mxu0 0
        %757 = vmatprep.subr.bf16.mxu0 0
        %758 = vmatpush1.bf16.msra.mxu0 0
        %759 = vmatprep.subr.bf16.mxu0 0
        %760 = vmatpush1.bf16.msra.mxu0 0
        %761 = vmatprep.subr.bf16.mxu0 0
        %762 = vmatpush1.bf16.msra.mxu0 0
        %763 = vmatprep.subr.bf16.mxu0 0
        %764 = vmatpush1.bf16.msra.mxu0 0
        %765 = vmatprep.subr.bf16.mxu0 0
        %766 = vmatpush1.bf16.msra.mxu0 0
        %767 = vmatprep.subr.bf16.mxu0 0
        %768 = vmatpush1.bf16.msra.mxu0 0
        %769 = vmatprep.mubr.bf16.mxu0 0
        %770 = vmatmul.mubr.bf16.gmra.mrb[0].mxu0 %v729
        %v771 = vpop.f32.mrb[0].mxu0
        %v772 = vadd.f32 0.0, %v771
        %v773 = vpop.f32.mrb[0].mxu0
        %v774 = vadd.f32 0.0, %v773
        %v775 = vpop.f32.mrb[0].mxu0
        %v776 = vadd.f32 0.0, %v775
        %v777 = vpop.f32.mrb[0].mxu0
        %v778 = vadd.f32 0.0, %v777
        %779 = vdwg.mxu0
        %v780 = vadd.f32 %v680, %v772
        %v781 = vadd.f32 %v681, %v774
        %v782 = vadd.f32 %v682, %v776
        %v783 = vadd.f32 %v683, %v778
        %784 = vrot.lane.b32.xlu0 %v473, 113
        %v785 = vpop.permute.xlu0 %784
        %786 = vrot.lane.b32.xlu0 %v469, 113
        %v787 = vpop.permute.xlu0 %786
        %vm788 = vcmask 924672
        %v789 = vsel %vm788, %v785, %v787
        %vm791 = vcmask 924672
        %v794 = vsel %vm791, %v787, %v785
        %v796 = vmul.bf16 %v789, %v513
        %v797 = vmul.bf16 %v794, %v520
        %798 = vrot.lane.b32.xlu0 %v473, 112
        %v799 = vpop.permute.xlu0 %798
        %800 = vrot.lane.b32.xlu0 %v469, 112
        %v801 = vpop.permute.xlu0 %800
        %vm802 = vcmask 916480
        %v803 = vsel %vm802, %v799, %v801
        %vm804 = vcmask 916480
        %v807 = vsel %vm804, %v801, %v799
        %808 = vrot.lane.b32.xlu0 %v473, 111
        %v809 = vpop.permute.xlu0 %808
        %810 = vrot.lane.b32.xlu0 %v469, 111
        %v811 = vpop.permute.xlu0 %810
        %vm812 = vcmask 908288
        %v813 = vsel %vm812, %v809, %v811
        %vm815 = vcmask 908288
        %v818 = vsel %vm815, %v811, %v809
        %v820 = vmul.bf16 %v813, %v574
        %v821 = vmul.bf16 %v818, %v581
        %v823 = vrot.slane %v803, 4
        %v824 = vrot.slane %v807, 4
        %v827 = vsel %vm587, %v796, %v823
        %v831 = vsel %vm587, %v797, %v824
        %s833 = scalar_lea.vmem %s384, 16 [#allocation5]
        %v834 = vld [vmem:[%s833] sm:$0xf]
        %v835 = vld [vmem:[%s833 + $0x4] sm:$0xf]
        %v838 = vunpack.c.l.b16 %v834
        %v839 = vunpack.c.l.b16 %v835
        %v840 = vpack.c.b16 %v839, %v838
        %v842 = vsel %vm603, %v840, 0
        %v845 = vsel %vm587, %v820, 0
        %v848 = vsel %vm587, %v821, 0
        %850 = vmatprep.subr.bf16.mxu0 %v831
        %851 = vmatpush1.bf16.msra.mxu0 %v827
        %852 = vmatprep.subr.bf16.mxu0 %v848
        %853 = vmatpush1.bf16.msra.mxu0 %v845
        %854 = vmatprep.subr.bf16.mxu0 0
        %855 = vmatpush1.bf16.msra.mxu0 0
        %856 = vmatprep.subr.bf16.mxu0 0
        %857 = vmatpush1.bf16.msra.mxu0 0
        %858 = vmatprep.subr.bf16.mxu0 0
        %859 = vmatpush1.bf16.msra.mxu0 0
        %860 = vmatprep.subr.bf16.mxu0 0
        %861 = vmatpush1.bf16.msra.mxu0 0
        %862 = vmatprep.subr.bf16.mxu0 0
        %863 = vmatpush1.bf16.msra.mxu0 0
        %864 = vmatprep.subr.bf16.mxu0 0
        %865 = vmatpush1.bf16.msra.mxu0 0
        %866 = vmatprep.subr.bf16.mxu0 0
        %867 = vmatpush1.bf16.msra.mxu0 0
        %868 = vmatprep.subr.bf16.mxu0 0
        %869 = vmatpush1.bf16.msra.mxu0 0
        %870 = vmatprep.subr.bf16.mxu0 0
        %871 = vmatpush1.bf16.msra.mxu0 0
        %872 = vmatprep.subr.bf16.mxu0 0
        %873 = vmatpush1.bf16.msra.mxu0 0
        %874 = vmatprep.subr.bf16.mxu0 0
        %875 = vmatpush1.bf16.msra.mxu0 0
        %876 = vmatprep.subr.bf16.mxu0 0
        %877 = vmatpush1.bf16.msra.mxu0 0
        %878 = vmatprep.subr.bf16.mxu0 0
        %879 = vmatpush1.bf16.msra.mxu0 0
        %880 = vmatprep.subr.bf16.mxu0 0
        %881 = vmatpush1.bf16.msra.mxu0 0
        %882 = vmatprep.mubr.bf16.mxu0 0
        %883 = vmatmul.mubr.bf16.gmra.mrb[0].mxu0 %v842
        %v884 = vpop.f32.mrb[0].mxu0
        %v885 = vadd.f32 0.0, %v884
        %v886 = vpop.f32.mrb[0].mxu0
        %v887 = vadd.f32 0.0, %v886
        %v888 = vpop.f32.mrb[0].mxu0
        %v889 = vadd.f32 0.0, %v888
        %v890 = vpop.f32.mrb[0].mxu0
        %v891 = vadd.f32 0.0, %v890
        %892 = vdwg.mxu0
        %v893 = vunpack.c.l.bf16 %v466
        %v895 = vlaneseq
        %v896 = vshrl.u32 %v895, 7
        %v897 = vsub.s32 0, %v896
        %v898 = vrot.slane %v893, %v897
        %v899 = vlaneseq
        %v900 = vshrl.u32 %v899, 7
        %v901 = vsub.s32 2, %v900
        %v902 = vrot.slane %v893, %v901
        %v905 = vlaneseq
        %v906 = vshrl.u32 %v905, 7
        %v907 = vsub.s32 0, %v906
        %v908 = vrot.slane %v898, %v907
        %v909 = vlaneseq
        %v910 = vshrl.u32 %v909, 7
        %v911 = vsub.s32 0, %v910
        %v912 = vrot.slane %v902, %v911
        %v913 = vmul.f32 %v885, %v908
        %v914 = vmul.f32 %v887, %v912
        %v915 = vmul.f32 %v889, %v908
        %v916 = vmul.f32 %v891, %v912
        %v917 = vadd.f32 %v780, %v913
        %v918 = vadd.f32 %v781, %v914
        %v919 = vadd.f32 %v782, %v915
        %v920 = vadd.f32 %v783, %v916
        %v921 = vld [vmem:[%s401] sm:$0xff]
        %v922 = vld [vmem:[%s401 + $0x8] sm:$0xff]
        %924 = vset.pattern.permute.xlu0 0
        %925 = vperm.xlu0 %924, %v921
        %v926 = vpop.permute.xlu0 %925
        %929 = vset.pattern.permute.xlu0 0
        %930 = vperm.xlu0 %929, %v922
        %v931 = vpop.permute.xlu0 %930
        %v933 = vadd.f32 %v917, %v926
        %v934 = vadd.f32 %v918, %v926
        %v935 = vadd.f32 %v919, %v931
        %v936 = vadd.f32 %v920, %v931
        %v937 = vadd.f32 %v933, %v934
        %938 = vadd.xlane.f32.xlu0 %v937
        %v939 = vpop.xlane.xlu0 %938
        %v940 = vadd.f32 %v935, %v936
        %941 = vadd.xlane.f32.xlu0 %v940
        %v942 = vpop.xlane.xlu0 %941
        %v943 = vmul.f32 %v933, %v933
        %v944 = vmul.f32 %v934, %v934
        %v945 = vmul.f32 %v935, %v935
        %v946 = vmul.f32 %v936, %v936
        %v947 = vadd.f32 %v943, %v944
        %948 = vadd.xlane.f32.xlu0 %v947
        %v949 = vpop.xlane.xlu0 %948
        %v950 = vadd.f32 %v945, %v946
        %951 = vadd.xlane.f32.xlu0 %v950
        %v952 = vpop.xlane.xlu0 %951
        %v953 = vld [vmem:[#allocation8] sm:$0xff]
        %v954 = vld [vmem:[#allocation8 + $0x8] sm:$0xff]
        %v955 = vsel %vm691, %v939, %v949
        %v956 = vsel %vm691, %v942, %v952
        %v958 = vsel %vm529, %v953, 0
        %v961 = vsel %vm529, %v954, 0
        %963 = vmatprep.subr.mxu0 0.0
        %964 = vmatpush1.msra.mxu0 %v955
        %965 = vmatprep.subr.mxu0 0.0
        %966 = vmatpush1.msra.mxu0 %v956
        %967 = vmatprep.subr.mxu0 0.0
        %968 = vmatpush1.msra.mxu0 0.0
        %969 = vmatprep.subr.mxu0 0.0
        %970 = vmatpush1.msra.mxu0 0.0
        %971 = vmatprep.subr.mxu0 0.0
        %972 = vmatpush1.msra.mxu0 0.0
        %973 = vmatprep.subr.mxu0 0.0
        %974 = vmatpush1.msra.mxu0 0.0
        %975 = vmatprep.subr.mxu0 0.0
        %976 = vmatpush1.msra.mxu0 0.0
        %977 = vmatprep.subr.mxu0 0.0
        %978 = vmatpush1.msra.mxu0 0.0
        %979 = vmatprep.subr.mxu0 0.0
        %980 = vmatpush1.msra.mxu0 0.0
        %981 = vmatprep.subr.mxu0 0.0
        %982 = vmatpush1.msra.mxu0 0.0
        %983 = vmatprep.subr.mxu0 0.0
        %984 = vmatpush1.msra.mxu0 0.0
        %985 = vmatprep.subr.mxu0 0.0
        %986 = vmatpush1.msra.mxu0 0.0
        %987 = vmatprep.subr.mxu0 0.0
        %988 = vmatpush1.msra.mxu0 0.0
        %989 = vmatprep.subr.mxu0 0.0
        %990 = vmatpush1.msra.mxu0 0.0
        %991 = vmatprep.subr.mxu0 0.0
        %992 = vmatpush1.msra.mxu0 0.0
        %993 = vmatprep.subr.mxu0 0.0
        %994 = vmatpush1.msra.mxu0 0.0
        %995 = vmatprep.subr.mxu0 0.0
        %996 = vmatpush1.msra.mxu0 0.0
        %997 = vmatprep.subr.mxu0 0.0
        %998 = vmatpush1.msra.mxu0 0.0
        %999 = vmatprep.subr.mxu0 0.0
        %1000 = vmatpush1.msra.mxu0 0.0
        %1001 = vmatprep.subr.mxu0 0.0
        %1002 = vmatpush1.msra.mxu0 0.0
        %1003 = vmatprep.subr.mxu0 0.0
        %1004 = vmatpush1.msra.mxu0 0.0
        %1005 = vmatprep.subr.mxu0 0.0
        %1006 = vmatpush1.msra.mxu0 0.0
        %1007 = vmatprep.subr.mxu0 0.0
        %1008 = vmatpush1.msra.mxu0 0.0
        %1009 = vmatprep.subr.mxu0 0.0
        %1010 = vmatpush1.msra.mxu0 0.0
        %1011 = vmatprep.subr.mxu0 0.0
        %1012 = vmatpush1.msra.mxu0 0.0
        %1013 = vmatprep.subr.mxu0 0.0
        %1014 = vmatpush1.msra.mxu0 0.0
        %1015 = vmatprep.subr.mxu0 0.0
        %1016 = vmatpush1.msra.mxu0 0.0
        %1017 = vmatprep.subr.mxu0 0.0
        %1018 = vmatpush1.msra.mxu0 0.0
        %1019 = vmatprep.subr.mxu0 0.0
        %1020 = vmatpush1.msra.mxu0 0.0
        %1021 = vmatprep.subr.mxu0 0.0
        %1022 = vmatpush1.msra.mxu0 0.0
        %1023 = vmatprep.subr.mxu0 0.0
        %1024 = vmatpush1.msra.mxu0 0.0
        %1025 = vmatprep.subr.mxu0 0.0
        %1026 = vmatpush1.msra.mxu0 0.0
        %1027 = vmatprep.mubr.f32.mxu0 0.0
        %1028 = vmatmul.mubr.f32.gmra.mrb[0].mxu0 %v958
        %v1029 = vpop.f32.mrb[0].mxu0
        %v1030 = vadd.f32 0.0, %v1029
        %v1031 = vpop.f32.mrb[0].mxu0
        %1032 = vmatprep.mubr.f32.mxu0 0.0
        %1033 = vmatmul.mubr.f32.gmra.mrb[0].mxu0 %v961
        %v1034 = vpop.f32.mrb[0].mxu0
        %v1035 = vadd.f32 0.0, %v1034
        %v1036 = vpop.f32.mrb[0].mxu0
        %1037 = vdwg.mxu0
        %v1038 = vmul.f32 %v1030, %v1030
        %v1039 = vmul.f32 %v1035, %v1035
        %1042 = vrot.lane.b32.xlu0 %v1038, 1
        %v1043 = vpop.permute.xlu0 %1042
        %1044 = vrot.lane.b32.xlu0 %v1039, 1
        %v1045 = vpop.permute.xlu0 %1044
        %v1048 = vsub.f32 %v1030, %v1043
        %v1049 = vsub.f32 %v1035, %v1045
        %1051 = vset.pattern.permute.xlu0 0
        %1052 = vperm.xlu0 %1051, %v1030
        %v1053 = vpop.permute.xlu0 %1052
        %1056 = vset.pattern.permute.xlu0 0
        %1057 = vperm.xlu0 %1056, %v1035
        %v1058 = vpop.permute.xlu0 %1057
        %v1060 = vsub.f32 %v933, %v1053
        %v1061 = vsub.f32 %v934, %v1053
        %v1062 = vsub.f32 %v935, %v1058
        %v1063 = vsub.f32 %v936, %v1058
        %v1064 = vadd.f32 %v1048, 1e-05
        %v1065 = vadd.f32 %v1049, 1e-05
        %v1066 = vrsqrt.pop %v1064
        %v1067 = vrsqrt.pop %v1065
        %1069 = vset.pattern.permute.xlu0 1
        %1070 = vperm.xlu0 %1069, %v1066
        %v1071 = vpop.permute.xlu0 %1070
        %1074 = vset.pattern.permute.xlu0 1
        %1075 = vperm.xlu0 %1074, %v1067
        %v1076 = vpop.permute.xlu0 %1075
        %v1078 = vmul.f32 %v1060, %v1071
        %v1079 = vmul.f32 %v1061, %v1071
        %v1080 = vmul.f32 %v1062, %v1076
        %v1081 = vmul.f32 %v1063, %v1076
        %1082 = vset.pattern.permute.xlu0 1
        %1083 = vperm.xlu0 %1082, %v921
        %v1084 = vpop.permute.xlu0 %1083
        %1086 = vset.pattern.permute.xlu0 1
        %1087 = vperm.xlu0 %1086, %v922
        %v1088 = vpop.permute.xlu0 %1087
        %v1090 = vmul.f32 %v1078, %v1084
        %v1091 = vmul.f32 %v1079, %v1084
        %v1092 = vmul.f32 %v1080, %v1088
        %v1093 = vmul.f32 %v1081, %v1088
        %1094 = vset.pattern.permute.xlu0 2
        %1095 = vperm.xlu0 %1094, %v921
        %v1096 = vpop.permute.xlu0 %1095
        %1098 = vset.pattern.permute.xlu0 2
        %1099 = vperm.xlu0 %1098, %v922
        %v1100 = vpop.permute.xlu0 %1099
        %v1102 = vadd.f32 %v1090, %v1096
        %v1103 = vadd.f32 %v1091, %v1096
        %v1104 = vadd.f32 %v1092, %v1100
        %v1105 = vadd.f32 %v1093, %v1100
        %v1106 = vld [vmem:[%s410] sm:$0xff]
        %v1107 = vld [vmem:[%s410 + $0x8] sm:$0xff]
        %v1108 = vadd.f32 %v1106, 1.0
        %v1109 = vadd.f32 %v1107, 1.0
        %1111 = vset.pattern.permute.xlu0 0
        %1112 = vperm.xlu0 %1111, %v1108
        %v1113 = vpop.permute.xlu0 %1112
        %1116 = vset.pattern.permute.xlu0 0
        %1117 = vperm.xlu0 %1116, %v1109
        %v1118 = vpop.permute.xlu0 %1117
        %v1120 = vmul.f32 %v1102, %v1113
        %v1121 = vmul.f32 %v1103, %v1113
        %v1122 = vmul.f32 %v1104, %v1118
        %v1123 = vmul.f32 %v1105, %v1118
        %1125 = vset.pattern.permute.xlu0 1
        %1126 = vperm.xlu0 %1125, %v1106
        %v1127 = vpop.permute.xlu0 %1126
        %1130 = vset.pattern.permute.xlu0 1
        %1131 = vperm.xlu0 %1130, %v1107
        %v1132 = vpop.permute.xlu0 %1131
        %v1134 = vadd.f32 %v1120, %v1127
        %v1135 = vadd.f32 %v1121, %v1127
        %v1136 = vadd.f32 %v1122, %v1132
        %v1137 = vadd.f32 %v1123, %v1132
        %v1138 = vxor.u32 %v1134, 2147483648
        %v1139 = vxor.u32 %v1135, 2147483648
        %v1140 = vxor.u32 %v1136, 2147483648
        %v1141 = vxor.u32 %v1137, 2147483648
        %v1142 = vmul.f32 %v1138, 1.442695
        %v1143 = vpow.pop %v1142
        %v1144 = vmul.f32 %v1139, 1.442695
        %v1145 = vpow.pop %v1144
        %v1146 = vmul.f32 %v1140, 1.442695
        %v1147 = vpow.pop %v1146
        %v1148 = vmul.f32 %v1141, 1.442695
        %v1149 = vpow.pop %v1148
        %v1150 = vadd.f32 %v1143, 1.0
        %v1151 = vadd.f32 %v1145, 1.0
        %v1152 = vadd.f32 %v1147, 1.0
        %v1153 = vadd.f32 %v1149, 1.0
        %v1154 = vrcp.pop %v1150
        %v1155 = vmul.f32 1.0, %v1154
        %v1156 = vrcp.pop %v1151
        %v1157 = vmul.f32 1.0, %v1156
        %v1158 = vrcp.pop %v1152
        %v1159 = vmul.f32 1.0, %v1158
        %v1160 = vrcp.pop %v1153
        %v1161 = vmul.f32 1.0, %v1160
        %v1162 = vmul.f32 %v1134, %v1155
        %v1163 = vmul.f32 %v1135, %v1157
        %v1164 = vmul.f32 %v1136, %v1159
        %v1165 = vmul.f32 %v1137, %v1161
        %v1166 = vpack.c.bf16 %v1164, %v1162
        %v1167 = vpack.c.bf16 %v1165, %v1163
        %v1170 = vunpack.c.l.b16 %v1166
        %v1171 = vunpack.c.l.b16 %v1167
        %v1172 = vunpack.c.h.b16 %v1166
        %v1173 = vunpack.c.h.b16 %v1167
        %v1174 = vpack.c.b16 %v1171, %v1170
        %v1175 = vpack.c.b16 %v1173, %v1172
        %1178 = vst [vmem:[%s453] sm:$0xff] %v1174
        %1179 = vst [vmem:[%s453 + $0x8] sm:$0xff] %v1175
        %s1180 = sand.u32 %s197, 1
        %s1181 = scalar_lea.sflag [#allocation4], %s1180
        %s1182 = sand.u32 %s197, 1
        %s1183 = smul.addr %s1182, 16
        %s1184 = scalar_lea.vmem [#allocation12], %s1183
        // Predicated region
        $region69: #{tpu_custom_call.1} parent=43 // pred_check
          %p1185 = pneg %p207
        $region70: #{tpu_custom_call.1} parent=43 // pred_check_branch
          %1187 = sbr.rel (%p1185) target = $region72
        $region71: #{tpu_custom_call.1} parent=43 // pred_region
          %s1188 = smul.u32 2, %s32
          %s1190 = ssub.s32 256, 256
          %1191 = vsyncadd %s1181, %s1190
          %s1192 = smul.addr %s1188, 2
          %s1193 = smul.addr %s31, 8
          %s1194 = sadd.s32 %s1192, %s1193
          %s1195 = smul.addr %s1194, 64
          %s1196 = scalar_lea.hbm %s6, %s1195
          %s1197 = sshll.u32 %s1184, 4
          %s1198 = int_to_ptr.vmem [resolvable:$true] %s1197
          %1203 = dma.vmem_to_hbm [thread:$0]  %s1198, 256, %s1196, %s1181, 128, 128, 8
        $region72: #{tpu_custom_call.1} parent=43 // pred_fallthru
          _
      $region44: #{tpu_custom_call.1} parent=5 // pred_fallthru
        _
      %p1204 = scmp.le.s32.totalorder 2, %s22
      // Predicated region
      $region73: #{tpu_custom_call.1} parent=5 // pred_check
        %p1205 = pneg %p1204
      $region74: #{tpu_custom_call.1} parent=5 // pred_check_branch
        %1207 = sbr.rel (%p1205) target = $region76
      $region75: #{tpu_custom_call.1} parent=5 // pred_region
        %s1208 = ssub.s32 %s22, 2
        // Predicated region
        $region77: #{tpu_custom_call.1} parent=75 // pred_check
          %p1209 = pneg %p213
        $region78: #{tpu_custom_call.1} parent=75 // pred_check_branch
          %1211 = sbr.rel (%p1209) target = $region80
        $region79: #{tpu_custom_call.1} parent=75 // pred_region
          %s1212 = sand.u32 %s198, 1
          %s1213 = scalar_lea.sflag [#allocation4], %s1212
          %s1214 = sand.u32 %s198, 1
          %s1215 = smul.addr %s1214, 16
          %s1216 = scalar_lea.vmem [#allocation12], %s1215
          %1217 = dma.done %s1213, 256
        $region80: #{tpu_custom_call.1} parent=75 // pred_fallthru
          _
      $region76: #{tpu_custom_call.1} parent=5 // pred_fallthru
        _
    $region6: #{tpu_custom_call.1} parent=1 // loop_footer
      %s26 = sadd.s32 1, %s22
    $region7: #{tpu_custom_call.1} parent=1 // loop_footer_branch
      %21 = sbr.rel target = $region3
    $region8: #{tpu_custom_call.1} parent=1 // loop_exit
      _
    %1218 = vsyncpa [#allocation3], 1
    %s1219 = scalar_lea.sflag [#allocation3], 1
    %1220 = vsyncpa %s1219, 1
    %1221 = vsyncpa [#allocation6], 1
    %s1222 = scalar_lea.sflag [#allocation6], 1
    %1223 = vsyncpa %s1222, 1
    %1224 = vsyncpa [#allocation9], 1
    %1225 = vsyncpa [#allocation4], 1
    %s1226 = scalar_lea.sflag [#allocation4], 1
    %1227 = vsyncpa %s1226, 1

</llo_original>
